<compile_context>
chip_gen: v7x
topology: tpu7x:2x2x1
jax: 0.10.0
libtpu: 0.0.40
codegen_flags: <defaults>
</compile_context>

<pallas_src>
import functools

import jax
import jax.numpy as jnp
from jax.experimental import pallas as pl
from jax.experimental.pallas import tpu as pltpu

NATURE_FC_HIDDEN_SIZE = 512
_CONV_SPECS = ((32, 8, 4), (64, 4, 2), (64, 3, 1))  # (cout, kernel, stride)


# ---------------------------------------------------------------------------
# Pallas kernel: out = relu(A @ W + b)   (bf16 MXU inputs, f32 accumulation)
# ---------------------------------------------------------------------------
def _matmul_bias_act_kernel(a_ref, w_ref, b_ref, o_ref, *, apply_relu):
    acc = jnp.dot(a_ref[...], w_ref[...], preferred_element_type=jnp.float32)
    acc = acc + b_ref[...]
    if apply_relu:
        acc = jnp.maximum(acc, 0.0)
    o_ref[...] = acc.astype(o_ref.dtype)


def matmul_bias_act(a, w, b, *, relu, out_dtype, tm=512):
    """act(a @ w + b).  a:(M,K) bf16, w:(K,N) bf16, b:(1,N) f32.

    No host-side padding: K/N use full-extent blocks, M is tiled by the grid
    (boundary blocks are clipped by Pallas).  W and b use constant index maps
    so they are fetched once and stay resident in VMEM across the grid.
    """
    M, K = a.shape
    _, N = w.shape
    if M <= tm:
        tm_eff, grid = M, (1,)          # single full-extent block
    else:
        tm_eff, grid = tm, (pl.cdiv(M, tm),)

    kernel = functools.partial(_matmul_bias_act_kernel, apply_relu=relu)
    return pl.pallas_call(
        kernel,
        out_shape=jax.ShapeDtypeStruct((M, N), out_dtype),
        grid=grid,
        in_specs=[
            pl.BlockSpec((tm_eff, K), lambda i: (i, 0)),
            pl.BlockSpec((K, N), lambda i: (0, 0)),   # weights: VMEM-resident
            pl.BlockSpec((1, N), lambda i: (0, 0)),   # bias:    VMEM-resident
        ],
        out_specs=pl.BlockSpec((tm_eff, N), lambda i: (i, 0)),
        compiler_params=pltpu.CompilerParams(
            dimension_semantics=("parallel",),
            vmem_limit_bytes=48 * 1024 * 1024,
        ),
    )(a, w, b)


# ---------------------------------------------------------------------------
# im2col for NHWC activations (plain-XLA gather glue; no pads, no transposes)
# ---------------------------------------------------------------------------
def _im2col_nhwc(x, k, stride):
    """x: (B, H, W, C) -> ((B*Ho*Wo, k*k*C), Ho, Wo).  K order = (ki, kj, c)."""
    B, H, W, C = x.shape
    Ho = (H - k) // stride + 1
    Wo = (W - k) // stride + 1
    taps = []
    for i in range(k):
        for j in range(k):
            taps.append(x[:, i:i + stride * Ho:stride, j:j + stride * Wo:stride, :])
    p = jnp.stack(taps, axis=3)                       # (B, Ho, Wo, k*k, C)
    return p.reshape(B * Ho * Wo, k * k * C), Ho, Wo


# ---------------------------------------------------------------------------
# Parameters: torch-layout init + one-time prep into kernel-ready form
# ---------------------------------------------------------------------------
def _conv_out_hw(H, W):
    h, w = H, W
    for _, k, s in _CONV_SPECS:
        h = (h - k) // s + 1
        w = (w - k) // s + 1
    return h, w


def init_nature_trunk_params(key, input_shape):
    """Torch-layout parameters.  input_shape = (H, W, C)."""
    H, W, C = input_shape
    cins = (C, 32, 64)
    params = {}
    keys = jax.random.split(key, 8)
    ki = 0
    for li, ((cout, k, _), cin) in enumerate(zip(_CONV_SPECS, cins), start=1):
        fan_in = cin * k * k
        bound = 1.0 / jnp.sqrt(fan_in)
        params[f"w{li}"] = jax.random.uniform(
            keys[ki], (cout, cin, k, k), jnp.float32, -bound, bound); ki += 1
        params[f"b{li}"] = jax.random.uniform(
            keys[ki], (cout,), jnp.float32, -bound, bound); ki += 1
    h3, w3 = _conv_out_hw(H, W)
    flat = _CONV_SPECS[-1][0] * h3 * w3
    bound = 1.0 / jnp.sqrt(flat)
    params["w_fc"] = jax.random.uniform(          # rows in torch NCHW-flatten order
        keys[ki], (flat, NATURE_FC_HIDDEN_SIZE), jnp.float32, -bound, bound); ki += 1
    params["b_fc"] = jax.random.uniform(
        keys[ki], (NATURE_FC_HIDDEN_SIZE,), jnp.float32, -bound, bound)
    return params


def prepare_params(params, input_shape):
    """One-time conversion to kernel-ready form:
    - conv weights -> (k*k*Cin, Cout) matching NHWC im2col K order, bf16
    - x/255.0 folded into conv1 weights
    - w_fc rows permuted from NCHW-flatten order to NHWC-flatten order, bf16
    - biases as (1, N) f32 (added to the f32 accumulator in-kernel)
    """
    H, W, _ = input_shape
    prep = {}
    for li, (cout, k, _) in enumerate(_CONV_SPECS, start=1):
        wt = params[f"w{li}"]                                 # (Cout, Cin, k, k)
        wm = jnp.transpose(wt, (2, 3, 1, 0)).reshape(-1, cout)  # (k*k*Cin, Cout)
        if li == 1:
            wm = wm * (1.0 / 255.0)        # fold the x/255.0 into conv1 weights
        prep[f"w{li}"] = wm.astype(jnp.bfloat16)
        prep[f"b{li}"] = params[f"b{li}"].reshape(1, cout).astype(jnp.float32)
    h3, w3 = _conv_out_hw(H, W)
    c3 = _CONV_SPECS[-1][0]
    wfc = params["w_fc"].reshape(c3, h3, w3, NATURE_FC_HIDDEN_SIZE)
    wfc = jnp.transpose(wfc, (1, 2, 0, 3)).reshape(h3 * w3 * c3, NATURE_FC_HIDDEN_SIZE)
    prep["w_fc"] = wfc.astype(jnp.bfloat16)
    prep["b_fc"] = params["b_fc"].reshape(1, -1).astype(jnp.float32)
    return prep


# ---------------------------------------------------------------------------
# Forward pass
# ---------------------------------------------------------------------------
def nature_trunk_forward(x_nhwc, prepared):
    """x_nhwc: (B, H, W, C) frames (uint8 or float).  Returns (B, 512) f32."""
    B = x_nhwc.shape[0]
    # torch: x.float(); permute(0,3,1,2); x/255.0  — the permute is unnecessary
    # in NHWC form and the /255 is folded into w1; 0..255 is exact in bf16.
    x = x_nhwc.astype(jnp.bfloat16)
    for li, (cout, k, s) in enumerate(_CONV_SPECS, start=1):
        a, Ho, Wo = _im2col_nhwc(x, k, s)
        y = matmul_bias_act(a, prepared[f"w{li}"], prepared[f"b{li}"],
                            relu=True, out_dtype=jnp.bfloat16)
        x = y.reshape(B, Ho, Wo, cout)
    x = x.reshape(B, -1)        # NHWC flatten; w_fc rows permuted at prep time
    return matmul_bias_act(x, prepared["w_fc"], prepared["b_fc"],
                           relu=True, out_dtype=jnp.float32)


# Pure-JAX f32 reference (torch-layout weights, NCHW flatten) for validation.
def _reference_forward(x_nhwc, params):
    B = x_nhwc.shape[0]
    x = x_nhwc.astype(jnp.float32) / 255.0
    for li, (cout, k, s) in enumerate(_CONV_SPECS, start=1):
        a, Ho, Wo = _im2col_nhwc(x, k, s)
        wm = jnp.transpose(params[f"w{li}"], (2, 3, 1, 0)).reshape(-1, cout)
        y = jnp.maximum(a @ wm + params[f"b{li}"], 0.0)
        x = y.reshape(B, Ho, Wo, cout)
    xf = jnp.transpose(x, (0, 3, 1, 2)).reshape(B, -1)   # torch NCHW flatten
    return jnp.maximum(xf @ params["w_fc"] + params["b_fc"], 0.0)


if __name__ == "__main__":
    # Smallest spatial size for which the Nature conv stack reduces to 1x1.
    B, H, W, C = 2, 36, 36, 4
    key = jax.random.PRNGKey(0)
    k_x, k_p = jax.random.split(key)
    x = jax.random.randint(k_x, (B, H, W, C), 0, 256, dtype=jnp.int32).astype(jnp.uint8)

    params = init_nature_trunk_params(k_p, (H, W, C))
    prepared = prepare_params(params, (H, W, C))   # one-time weight prep

    out = jax.jit(nature_trunk_forward)(x, prepared)
    out = jax.block_until_ready(out)
    assert out.shape == (B, NATURE_FC_HIDDEN_SIZE), out.shape
    assert out.dtype == jnp.float32

    ref = jax.jit(_reference_forward)(x, params)
    ref = jax.block_until_ready(ref)
    assert jnp.allclose(out, ref, rtol=5e-2, atol=5e-2), float(
        jnp.max(jnp.abs(out - ref)))

    print("KERNEL_OK")
</pallas_src>

<mosaic_0001>
module attributes {stable_mosaic.version = 11 : i64} {
  func.func @_matmul_bias_act_kernel(%arg0: i32, %arg1: memref<128x256xbf16, #tpu.memory_space<vmem>>, %arg2: memref<256x32xbf16, #tpu.memory_space<vmem>>, %arg3: memref<1x32xf32, #tpu.memory_space<vmem>>, %arg4: memref<128x32xbf16, #tpu.memory_space<vmem>>) attributes {dimension_semantics = [#tpu.dimension_semantics<parallel>], iteration_bounds = array<i64: 1>, scalar_prefetch = 0 : i64, scratch_operands = 0 : i64, tpu.core_type = #tpu.core_type<tc>, window_params = [{transform_indices = @transform_0, window_bounds = array<i64: 128, 256>}, {pipeline_mode = #tpu.pipeline_mode<synchronous>, transform_indices = @transform_1, window_bounds = array<i64: 256, 32>}, {pipeline_mode = #tpu.pipeline_mode<synchronous>, transform_indices = @transform_2, window_bounds = array<i64: 1, 32>}, {transform_indices = @transform_3, window_bounds = array<i64: 128, 32>}]} {
    %c0 = arith.constant 0 : index
    %c0_0 = arith.constant 0 : index
    %0 = vector.load %arg1[%c0, %c0_0] : memref<128x256xbf16, #tpu.memory_space<vmem>>, vector<128x256xbf16>
    %c0_1 = arith.constant 0 : index
    %c0_2 = arith.constant 0 : index
    %1 = vector.load %arg2[%c0_1, %c0_2] : memref<256x32xbf16, #tpu.memory_space<vmem>>, vector<256x32xbf16>
    %cst = arith.constant dense<0.000000e+00> : vector<128x32xf32>
    %2 = tpu.matmul %0, %1, %cst {dimension_numbers = #tpu.dot_dimension_numbers<[1], [0], [0], [1], [0, 0, 1, 1], [], []>} : vector<128x256xbf16>, vector<256x32xbf16>, vector<128x32xf32> -> vector<128x32xf32>
    %c0_3 = arith.constant 0 : index
    %c0_4 = arith.constant 0 : index
    %3 = vector.load %arg3[%c0_3, %c0_4] : memref<1x32xf32, #tpu.memory_space<vmem>>, vector<1x32xf32>
    %4 = vector.broadcast %3 : vector<1x32xf32> to vector<128x32xf32>
    %5 = arith.addf %2, %4 : vector<128x32xf32>
    %cst_5 = arith.constant 0.000000e+00 : f32
    %6 = vector.broadcast %cst_5 : f32 to vector<128x32xf32>
    %7 = arith.maximumf %5, %6 : vector<128x32xf32>
    %8 = arith.truncf %7 : vector<128x32xf32> to vector<128x32xbf16>
    %c0_6 = arith.constant 0 : index
    %c0_7 = arith.constant 0 : index
    %9 = vector.load %arg4[%c0_6, %c0_7] : memref<128x32xbf16, #tpu.memory_space<vmem>>, vector<128x32xbf16>
    tpu.vector_store %arg4[%c0_6, %c0_7], %8 {strides = array<i32>} : memref<128x32xbf16, #tpu.memory_space<vmem>>, vector<128x32xbf16>,
    return
  }
  func.func @transform_0(%arg0: i32) -> (i32, i32) {
    %c0_i32 = arith.constant 0 : i32
    %c0_i32_0 = arith.constant 0 : i32
    return %arg0, %c0_i32 : i32, i32
  }
  func.func @transform_1(%arg0: i32) -> (i32, i32) {
    %c0_i32 = arith.constant 0 : i32
    %c0_i32_0 = arith.constant 0 : i32
    %c0_i32_1 = arith.constant 0 : i32
    return %c0_i32, %c0_i32_0 : i32, i32
  }
  func.func @transform_2(%arg0: i32) -> (i32, i32) {
    %c0_i32 = arith.constant 0 : i32
    %c0_i32_0 = arith.constant 0 : i32
    %c0_i32_1 = arith.constant 0 : i32
    return %c0_i32, %c0_i32_0 : i32, i32
  }
  func.func @transform_3(%arg0: i32) -> (i32, i32) {
    %c0_i32 = arith.constant 0 : i32
    %c0_i32_0 = arith.constant 0 : i32
    return %arg0, %c0_i32 : i32, i32
  }
}

module attributes {stable_mosaic.version = 11 : i64} {
  func.func @_matmul_bias_act_kernel(%arg0: i32, %arg1: memref<18x512xbf16, #tpu.memory_space<vmem>>, %arg2: memref<512x64xbf16, #tpu.memory_space<vmem>>, %arg3: memref<1x64xf32, #tpu.memory_space<vmem>>, %arg4: memref<18x64xbf16, #tpu.memory_space<vmem>>) attributes {dimension_semantics = [#tpu.dimension_semantics<parallel>], iteration_bounds = array<i64: 1>, scalar_prefetch = 0 : i64, scratch_operands = 0 : i64, tpu.core_type = #tpu.core_type<tc>, window_params = [{transform_indices = @transform_0, window_bounds = array<i64: 18, 512>}, {pipeline_mode = #tpu.pipeline_mode<synchronous>, transform_indices = @transform_1, window_bounds = array<i64: 512, 64>}, {pipeline_mode = #tpu.pipeline_mode<synchronous>, transform_indices = @transform_2, window_bounds = array<i64: 1, 64>}, {transform_indices = @transform_3, window_bounds = array<i64: 18, 64>}]} {
    %c0 = arith.constant 0 : index
    %c0_0 = arith.constant 0 : index
    %0 = vector.load %arg1[%c0, %c0_0] : memref<18x512xbf16, #tpu.memory_space<vmem>>, vector<18x512xbf16>
    %c0_1 = arith.constant 0 : index
    %c0_2 = arith.constant 0 : index
    %1 = vector.load %arg2[%c0_1, %c0_2] : memref<512x64xbf16, #tpu.memory_space<vmem>>, vector<512x64xbf16>
    %cst = arith.constant dense<0.000000e+00> : vector<18x64xf32>
    %2 = tpu.matmul %0, %1, %cst {dimension_numbers = #tpu.dot_dimension_numbers<[1], [0], [0], [1], [0, 0, 1, 1], [], []>} : vector<18x512xbf16>, vector<512x64xbf16>, vector<18x64xf32> -> vector<18x64xf32>
    %c0_3 = arith.constant 0 : index
    %c0_4 = arith.constant 0 : index
    %3 = vector.load %arg3[%c0_3, %c0_4] : memref<1x64xf32, #tpu.memory_space<vmem>>, vector<1x64xf32>
    %4 = vector.broadcast %3 : vector<1x64xf32> to vector<18x64xf32>
    %5 = arith.addf %2, %4 : vector<18x64xf32>
    %cst_5 = arith.constant 0.000000e+00 : f32
    %6 = vector.broadcast %cst_5 : f32 to vector<18x64xf32>
    %7 = arith.maximumf %5, %6 : vector<18x64xf32>
    %8 = arith.truncf %7 : vector<18x64xf32> to vector<18x64xbf16>
    %c0_6 = arith.constant 0 : index
    %c0_7 = arith.constant 0 : index
    %9 = vector.load %arg4[%c0_6, %c0_7] : memref<18x64xbf16, #tpu.memory_space<vmem>>, vector<18x64xbf16>
    tpu.vector_store %arg4[%c0_6, %c0_7], %8 {strides = array<i32>} : memref<18x64xbf16, #tpu.memory_space<vmem>>, vector<18x64xbf16>,
    return
  }
  func.func @transform_0(%arg0: i32) -> (i32, i32) {
    %c0_i32 = arith.constant 0 : i32
    %c0_i32_0 = arith.constant 0 : i32
    return %arg0, %c0_i32 : i32, i32
  }
  func.func @transform_1(%arg0: i32) -> (i32, i32) {
    %c0_i32 = arith.constant 0 : i32
    %c0_i32_0 = arith.constant 0 : i32
    %c0_i32_1 = arith.constant 0 : i32
    return %c0_i32, %c0_i32_0 : i32, i32
  }
  func.func @transform_2(%arg0: i32) -> (i32, i32) {
    %c0_i32 = arith.constant 0 : i32
    %c0_i32_0 = arith.constant 0 : i32
    %c0_i32_1 = arith.constant 0 : i32
    return %c0_i32, %c0_i32_0 : i32, i32
  }
  func.func @transform_3(%arg0: i32) -> (i32, i32) {
    %c0_i32 = arith.constant 0 : i32
    %c0_i32_0 = arith.constant 0 : i32
    return %arg0, %c0_i32 : i32, i32
  }
}

module attributes {stable_mosaic.version = 11 : i64} {
  func.func @_matmul_bias_act_kernel(%arg0: i32, %arg1: memref<2x64xbf16, #tpu.memory_space<vmem>>, %arg2: memref<64x512xbf16, #tpu.memory_space<vmem>>, %arg3: memref<1x512xf32, #tpu.memory_space<vmem>>, %arg4: memref<2x512xf32, #tpu.memory_space<vmem>>) attributes {dimension_semantics = [#tpu.dimension_semantics<parallel>], iteration_bounds = array<i64: 1>, scalar_prefetch = 0 : i64, scratch_operands = 0 : i64, tpu.core_type = #tpu.core_type<tc>, window_params = [{transform_indices = @transform_0, window_bounds = array<i64: 2, 64>}, {pipeline_mode = #tpu.pipeline_mode<synchronous>, transform_indices = @transform_1, window_bounds = array<i64: 64, 512>}, {pipeline_mode = #tpu.pipeline_mode<synchronous>, transform_indices = @transform_2, window_bounds = array<i64: 1, 512>}, {transform_indices = @transform_3, window_bounds = array<i64: 2, 512>}]} {
    %c0 = arith.constant 0 : index
    %c0_0 = arith.constant 0 : index
    %0 = vector.load %arg1[%c0, %c0_0] : memref<2x64xbf16, #tpu.memory_space<vmem>>, vector<2x64xbf16>
    %c0_1 = arith.constant 0 : index
    %c0_2 = arith.constant 0 : index
    %1 = vector.load %arg2[%c0_1, %c0_2] : memref<64x512xbf16, #tpu.memory_space<vmem>>, vector<64x512xbf16>
    %cst = arith.constant dense<0.000000e+00> : vector<2x512xf32>
    %2 = tpu.matmul %0, %1, %cst {dimension_numbers = #tpu.dot_dimension_numbers<[1], [0], [0], [1], [0, 0, 1, 1], [], []>} : vector<2x64xbf16>, vector<64x512xbf16>, vector<2x512xf32> -> vector<2x512xf32>
    %c0_3 = arith.constant 0 : index
    %c0_4 = arith.constant 0 : index
    %3 = vector.load %arg3[%c0_3, %c0_4] : memref<1x512xf32, #tpu.memory_space<vmem>>, vector<1x512xf32>
    %4 = vector.broadcast %3 : vector<1x512xf32> to vector<2x512xf32>
    %5 = arith.addf %2, %4 : vector<2x512xf32>
    %cst_5 = arith.constant 0.000000e+00 : f32
    %6 = vector.broadcast %cst_5 : f32 to vector<2x512xf32>
    %7 = arith.maximumf %5, %6 : vector<2x512xf32>
    %c0_6 = arith.constant 0 : index
    %c0_7 = arith.constant 0 : index
    %8 = vector.load %arg4[%c0_6, %c0_7] : memref<2x512xf32, #tpu.memory_space<vmem>>, vector<2x512xf32>
    tpu.vector_store %arg4[%c0_6, %c0_7], %7 {strides = array<i32>} : memref<2x512xf32, #tpu.memory_space<vmem>>, vector<2x512xf32>,
    return
  }
  func.func @transform_0(%arg0: i32) -> (i32, i32) {
    %c0_i32 = arith.constant 0 : i32
    %c0_i32_0 = arith.constant 0 : i32
    return %arg0, %c0_i32 : i32, i32
  }
  func.func @transform_1(%arg0: i32) -> (i32, i32) {
    %c0_i32 = arith.constant 0 : i32
    %c0_i32_0 = arith.constant 0 : i32
    %c0_i32_1 = arith.constant 0 : i32
    return %c0_i32, %c0_i32_0 : i32, i32
  }
  func.func @transform_2(%arg0: i32) -> (i32, i32) {
    %c0_i32 = arith.constant 0 : i32
    %c0_i32_0 = arith.constant 0 : i32
    %c0_i32_1 = arith.constant 0 : i32
    return %c0_i32, %c0_i32_0 : i32, i32
  }
  func.func @transform_3(%arg0: i32) -> (i32, i32) {
    %c0_i32 = arith.constant 0 : i32
    %c0_i32_0 = arith.constant 0 : i32
    return %arg0, %c0_i32 : i32, i32
  }
}

module attributes {stable_mosaic.version = 11 : i64} {
  func.func @_matmul_bias_act_kernel(%arg0: i32, %arg1: memref<2x576xbf16, #tpu.memory_space<vmem>>, %arg2: memref<576x64xbf16, #tpu.memory_space<vmem>>, %arg3: memref<1x64xf32, #tpu.memory_space<vmem>>, %arg4: memref<2x64xbf16, #tpu.memory_space<vmem>>) attributes {dimension_semantics = [#tpu.dimension_semantics<parallel>], iteration_bounds = array<i64: 1>, scalar_prefetch = 0 : i64, scratch_operands = 0 : i64, tpu.core_type = #tpu.core_type<tc>, window_params = [{transform_indices = @transform_0, window_bounds = array<i64: 2, 576>}, {pipeline_mode = #tpu.pipeline_mode<synchronous>, transform_indices = @transform_1, window_bounds = array<i64: 576, 64>}, {pipeline_mode = #tpu.pipeline_mode<synchronous>, transform_indices = @transform_2, window_bounds = array<i64: 1, 64>}, {transform_indices = @transform_3, window_bounds = array<i64: 2, 64>}]} {
    %c0 = arith.constant 0 : index
    %c0_0 = arith.constant 0 : index
    %0 = vector.load %arg1[%c0, %c0_0] : memref<2x576xbf16, #tpu.memory_space<vmem>>, vector<2x576xbf16>
    %c0_1 = arith.constant 0 : index
    %c0_2 = arith.constant 0 : index
    %1 = vector.load %arg2[%c0_1, %c0_2] : memref<576x64xbf16, #tpu.memory_space<vmem>>, vector<576x64xbf16>
    %cst = arith.constant dense<0.000000e+00> : vector<2x64xf32>
    %2 = tpu.matmul %0, %1, %cst {dimension_numbers = #tpu.dot_dimension_numbers<[1], [0], [0], [1], [0, 0, 1, 1], [], []>} : vector<2x576xbf16>, vector<576x64xbf16>, vector<2x64xf32> -> vector<2x64xf32>
    %c0_3 = arith.constant 0 : index
    %c0_4 = arith.constant 0 : index
    %3 = vector.load %arg3[%c0_3, %c0_4] : memref<1x64xf32, #tpu.memory_space<vmem>>, vector<1x64xf32>
    %4 = vector.broadcast %3 : vector<1x64xf32> to vector<2x64xf32>
    %5 = arith.addf %2, %4 : vector<2x64xf32>
    %cst_5 = arith.constant 0.000000e+00 : f32
    %6 = vector.broadcast %cst_5 : f32 to vector<2x64xf32>
    %7 = arith.maximumf %5, %6 : vector<2x64xf32>
    %8 = arith.truncf %7 : vector<2x64xf32> to vector<2x64xbf16>
    %c0_6 = arith.constant 0 : index
    %c0_7 = arith.constant 0 : index
    %9 = vector.load %arg4[%c0_6, %c0_7] : memref<2x64xbf16, #tpu.memory_space<vmem>>, vector<2x64xbf16>
    tpu.vector_store %arg4[%c0_6, %c0_7], %8 {strides = array<i32>} : memref<2x64xbf16, #tpu.memory_space<vmem>>, vector<2x64xbf16>,
    return
  }
  func.func @transform_0(%arg0: i32) -> (i32, i32) {
    %c0_i32 = arith.constant 0 : i32
    %c0_i32_0 = arith.constant 0 : i32
    return %arg0, %c0_i32 : i32, i32
  }
  func.func @transform_1(%arg0: i32) -> (i32, i32) {
    %c0_i32 = arith.constant 0 : i32
    %c0_i32_0 = arith.constant 0 : i32
    %c0_i32_1 = arith.constant 0 : i32
    return %c0_i32, %c0_i32_0 : i32, i32
  }
  func.func @transform_2(%arg0: i32) -> (i32, i32) {
    %c0_i32 = arith.constant 0 : i32
    %c0_i32_0 = arith.constant 0 : i32
    %c0_i32_1 = arith.constant 0 : i32
    return %c0_i32, %c0_i32_0 : i32, i32
  }
  func.func @transform_3(%arg0: i32) -> (i32, i32) {
    %c0_i32 = arith.constant 0 : i32
    %c0_i32_0 = arith.constant 0 : i32
    return %arg0, %c0_i32 : i32, i32
  }
}

</mosaic_0001>

<llo_original>
// kernel: nature_trunk_forward.4
$region0: #{nature_trunk_forward.4}
  #allocation0 [shape = 'u32[]', space=smem, size = 0x4, offset = 0x4, fixed_abs, tag = 'smem constant byte address 0x4 - core index']
  #allocation1 [shape = 'u32[144,128]{1,0:T(1,128)}', space=vmem, size = 0x12000, scoped, tag = 'internal scratch']
  %s0 = inlined_call_operand.vmem [shape: bf16[128,256], index: 0, kind: input, shape index: {}]
  %s1 = inlined_call_operand.vmem [shape: bf16[256,32], index: 1, kind: input, shape index: {}]
  %s2 = inlined_call_operand.vmem [shape: f32[1,32], index: 2, kind: input, shape index: {}]
  %s3 = inlined_call_operand.vmem [shape: bf16[128,32], index: 3, kind: output, shape index: {}]
  %s4 = sld [smem:[#allocation0]]
  $region22: #{nature_trunk_forward.4} parent=0
    _
  %s6 = ssub.s32 1, %s4
  %s7 = scalar_select 0, %s6, %s4
  // Predicated region
  $region2: #{nature_trunk_forward.4} parent=0 // pred_check
    _
  $region3: #{nature_trunk_forward.4} parent=0 // pred_check_branch
    %9 = sbr.rel (0) target = $region5
  $region4: #{nature_trunk_forward.4} parent=0 // pred_region
    _
  $region5: #{nature_trunk_forward.4} parent=0 // pred_fallthru
    _
  // Predicated region
  $region6: #{nature_trunk_forward.4} parent=0 // pred_check
    _
  $region7: #{nature_trunk_forward.4} parent=0 // pred_check_branch
    %11 = sbr.rel (0) target = $region9
  $region8: #{nature_trunk_forward.4} parent=0 // pred_region
    _
  $region9: #{nature_trunk_forward.4} parent=0 // pred_fallthru
    _
  // Predicated region
  $region10: #{nature_trunk_forward.4} parent=0 // pred_check
    _
  $region11: #{nature_trunk_forward.4} parent=0 // pred_check_branch
    %13 = sbr.rel (0) target = $region13
  $region12: #{nature_trunk_forward.4} parent=0 // pred_region
    _
  $region13: #{nature_trunk_forward.4} parent=0 // pred_fallthru
    _
  %v15 = vld [vmem:[%s0] sm:$0xff]
  %v16 = vld [vmem:[%s0 + $0x8] sm:$0xff]
  %v17 = vld [vmem:[%s0 + $0x10] sm:$0xff]
  %v18 = vld [vmem:[%s0 + $0x18] sm:$0xff]
  %v19 = vld [vmem:[%s0 + $0x20] sm:$0xff]
  %v20 = vld [vmem:[%s0 + $0x28] sm:$0xff]
  %v21 = vld [vmem:[%s0 + $0x30] sm:$0xff]
  %v22 = vld [vmem:[%s0 + $0x38] sm:$0xff]
  %v23 = vld [vmem:[%s0 + $0x40] sm:$0xff]
  %v24 = vld [vmem:[%s0 + $0x48] sm:$0xff]
  %v25 = vld [vmem:[%s0 + $0x50] sm:$0xff]
  %v26 = vld [vmem:[%s0 + $0x58] sm:$0xff]
  %v27 = vld [vmem:[%s0 + $0x60] sm:$0xff]
  %v28 = vld [vmem:[%s0 + $0x68] sm:$0xff]
  %v29 = vld [vmem:[%s0 + $0x70] sm:$0xff]
  %v30 = vld [vmem:[%s0 + $0x78] sm:$0xff]
  %v31 = vld [vmem:[%s1] sm:$0xf]
  %v32 = vld [vmem:[%s1 + $0x4] sm:$0xf]
  %v33 = vld [vmem:[%s1 + $0x8] sm:$0xf]
  %v34 = vld [vmem:[%s1 + $0xc] sm:$0xf]
  %v35 = vld [vmem:[%s1 + $0x10] sm:$0xf]
  %v36 = vld [vmem:[%s1 + $0x14] sm:$0xf]
  %v37 = vld [vmem:[%s1 + $0x18] sm:$0xf]
  %v38 = vld [vmem:[%s1 + $0x1c] sm:$0xf]
  %v39 = vld [vmem:[%s1 + $0x20] sm:$0xf]
  %v40 = vld [vmem:[%s1 + $0x24] sm:$0xf]
  %v41 = vld [vmem:[%s1 + $0x28] sm:$0xf]
  %v42 = vld [vmem:[%s1 + $0x2c] sm:$0xf]
  %v43 = vld [vmem:[%s1 + $0x30] sm:$0xf]
  %v44 = vld [vmem:[%s1 + $0x34] sm:$0xf]
  %v45 = vld [vmem:[%s1 + $0x38] sm:$0xf]
  %v46 = vld [vmem:[%s1 + $0x3c] sm:$0xf]
  %v47 = vld [vmem:[%s1 + $0x40] sm:$0xf]
  %v48 = vld [vmem:[%s1 + $0x44] sm:$0xf]
  %v49 = vld [vmem:[%s1 + $0x48] sm:$0xf]
  %v50 = vld [vmem:[%s1 + $0x4c] sm:$0xf]
  %v51 = vld [vmem:[%s1 + $0x50] sm:$0xf]
  %v52 = vld [vmem:[%s1 + $0x54] sm:$0xf]
  %v53 = vld [vmem:[%s1 + $0x58] sm:$0xf]
  %v54 = vld [vmem:[%s1 + $0x5c] sm:$0xf]
  %v55 = vld [vmem:[%s1 + $0x60] sm:$0xf]
  %v56 = vld [vmem:[%s1 + $0x64] sm:$0xf]
  %v57 = vld [vmem:[%s1 + $0x68] sm:$0xf]
  %v58 = vld [vmem:[%s1 + $0x6c] sm:$0xf]
  %v59 = vld [vmem:[%s1 + $0x70] sm:$0xf]
  %v60 = vld [vmem:[%s1 + $0x74] sm:$0xf]
  %v61 = vld [vmem:[%s1 + $0x78] sm:$0xf]
  %v62 = vld [vmem:[%s1 + $0x7c] sm:$0xf]
  %v63 = vld [vmem:[%s2] sm:$0x1]
  %v65 = vlaneseq
  %v66 = vshrl.u32 %v65, 7
  %v67 = vsub.s32 0, %v66
  %v68 = vrot.slane %v63, %v67
  %v86 = vunpack.c.l.b16 %v15
  %v87 = vunpack.c.h.b16 %v15
  %v88 = vunpack.c.l.b16 %v16
  %v89 = vunpack.c.h.b16 %v16
  %v90 = vunpack.c.l.b16 %v17
  %v91 = vunpack.c.h.b16 %v17
  %v92 = vunpack.c.l.b16 %v18
  %v93 = vunpack.c.h.b16 %v18
  %v94 = vunpack.c.l.b16 %v19
  %v95 = vunpack.c.h.b16 %v19
  %v96 = vunpack.c.l.b16 %v20
  %v97 = vunpack.c.h.b16 %v20
  %v98 = vunpack.c.l.b16 %v21
  %v99 = vunpack.c.h.b16 %v21
  %v100 = vunpack.c.l.b16 %v22
  %v101 = vunpack.c.h.b16 %v22
  %v102 = vunpack.c.l.b16 %v23
  %v103 = vunpack.c.h.b16 %v23
  %v104 = vunpack.c.l.b16 %v24
  %v105 = vunpack.c.h.b16 %v24
  %v106 = vunpack.c.l.b16 %v25
  %v107 = vunpack.c.h.b16 %v25
  %v108 = vunpack.c.l.b16 %v26
  %v109 = vunpack.c.h.b16 %v26
  %v110 = vunpack.c.l.b16 %v27
  %v111 = vunpack.c.h.b16 %v27
  %v112 = vunpack.c.l.b16 %v28
  %v113 = vunpack.c.h.b16 %v28
  %v114 = vunpack.c.l.b16 %v29
  %v115 = vunpack.c.h.b16 %v29
  %v116 = vunpack.c.l.b16 %v30
  %v117 = vunpack.c.h.b16 %v30
  %v118 = vpack.c.b16 %v88, %v86
  %v119 = vpack.c.b16 %v89, %v87
  %v120 = vpack.c.b16 %v92, %v90
  %v121 = vpack.c.b16 %v93, %v91
  %v122 = vpack.c.b16 %v96, %v94
  %v123 = vpack.c.b16 %v97, %v95
  %v124 = vpack.c.b16 %v100, %v98
  %v125 = vpack.c.b16 %v101, %v99
  %v126 = vpack.c.b16 %v104, %v102
  %v127 = vpack.c.b16 %v105, %v103
  %v128 = vpack.c.b16 %v108, %v106
  %v129 = vpack.c.b16 %v109, %v107
  %v130 = vpack.c.b16 %v112, %v110
  %v131 = vpack.c.b16 %v113, %v111
  %v132 = vpack.c.b16 %v116, %v114
  %v133 = vpack.c.b16 %v117, %v115
  %v182 = vunpack.c.l.b16 %v31
  %v183 = vunpack.c.l.b16 %v32
  %v184 = vunpack.c.l.b16 %v33
  %v185 = vunpack.c.l.b16 %v34
  %v186 = vunpack.c.l.b16 %v35
  %v187 = vunpack.c.l.b16 %v36
  %v188 = vunpack.c.l.b16 %v37
  %v189 = vunpack.c.l.b16 %v38
  %v190 = vunpack.c.l.b16 %v39
  %v191 = vunpack.c.l.b16 %v40
  %v192 = vunpack.c.l.b16 %v41
  %v193 = vunpack.c.l.b16 %v42
  %v194 = vunpack.c.l.b16 %v43
  %v195 = vunpack.c.l.b16 %v44
  %v196 = vunpack.c.l.b16 %v45
  %v197 = vunpack.c.l.b16 %v46
  %v198 = vunpack.c.l.b16 %v47
  %v199 = vunpack.c.l.b16 %v48
  %v200 = vunpack.c.l.b16 %v49
  %v201 = vunpack.c.l.b16 %v50
  %v202 = vunpack.c.l.b16 %v51
  %v203 = vunpack.c.l.b16 %v52
  %v204 = vunpack.c.l.b16 %v53
  %v205 = vunpack.c.l.b16 %v54
  %v206 = vunpack.c.l.b16 %v55
  %v207 = vunpack.c.l.b16 %v56
  %v208 = vunpack.c.l.b16 %v57
  %v209 = vunpack.c.l.b16 %v58
  %v210 = vunpack.c.l.b16 %v59
  %v211 = vunpack.c.l.b16 %v60
  %v212 = vunpack.c.l.b16 %v61
  %v213 = vunpack.c.l.b16 %v62
  %v214 = vpack.c.b16 %v183, %v182
  %v215 = vpack.c.b16 %v185, %v184
  %v216 = vpack.c.b16 %v187, %v186
  %v217 = vpack.c.b16 %v189, %v188
  %v218 = vpack.c.b16 %v191, %v190
  %v219 = vpack.c.b16 %v193, %v192
  %v220 = vpack.c.b16 %v195, %v194
  %v221 = vpack.c.b16 %v197, %v196
  %v222 = vpack.c.b16 %v199, %v198
  %v223 = vpack.c.b16 %v201, %v200
  %v224 = vpack.c.b16 %v203, %v202
  %v225 = vpack.c.b16 %v205, %v204
  %v226 = vpack.c.b16 %v207, %v206
  %v227 = vpack.c.b16 %v209, %v208
  %v228 = vpack.c.b16 %v211, %v210
  %v229 = vpack.c.b16 %v213, %v212
  %246 = vmatprep.subr.bf16.mxu0 0
  %247 = vmatpush1.bf16.msra.mxu0 %v214
  %248 = vmatprep.subr.bf16.mxu0 0
  %249 = vmatpush1.bf16.msra.mxu0 %v215
  %250 = vmatprep.subr.bf16.mxu0 0
  %251 = vmatpush1.bf16.msra.mxu0 %v216
  %252 = vmatprep.subr.bf16.mxu0 0
  %253 = vmatpush1.bf16.msra.mxu0 %v217
  %254 = vmatprep.subr.bf16.mxu0 0
  %255 = vmatpush1.bf16.msra.mxu0 %v218
  %256 = vmatprep.subr.bf16.mxu0 0
  %257 = vmatpush1.bf16.msra.mxu0 %v219
  %258 = vmatprep.subr.bf16.mxu0 0
  %259 = vmatpush1.bf16.msra.mxu0 %v220
  %260 = vmatprep.subr.bf16.mxu0 0
  %261 = vmatpush1.bf16.msra.mxu0 %v221
  %262 = vmatprep.subr.bf16.mxu0 0
  %263 = vmatpush1.bf16.msra.mxu0 %v222
  %264 = vmatprep.subr.bf16.mxu0 0
  %265 = vmatpush1.bf16.msra.mxu0 %v223
  %266 = vmatprep.subr.bf16.mxu0 0
  %267 = vmatpush1.bf16.msra.mxu0 %v224
  %268 = vmatprep.subr.bf16.mxu0 0
  %269 = vmatpush1.bf16.msra.mxu0 %v225
  %270 = vmatprep.subr.bf16.mxu0 0
  %271 = vmatpush1.bf16.msra.mxu0 %v226
  %272 = vmatprep.subr.bf16.mxu0 0
  %273 = vmatpush1.bf16.msra.mxu0 %v227
  %274 = vmatprep.subr.bf16.mxu0 0
  %275 = vmatpush1.bf16.msra.mxu0 %v228
  %276 = vmatprep.subr.bf16.mxu0 0
  %277 = vmatpush1.bf16.msra.mxu0 %v229
  %278 = vmatprep.mubr.bf16.mxu0 %v119
  %279 = vmatmul.mubr.bf16.gmra.mrb[0].mxu0 %v118
  %v280 = vpop.f32.mrb[0].mxu0
  %v281 = vadd.f32 %v68, %v280
  %v282 = vpop.f32.mrb[0].mxu0
  %v283 = vpop.f32.mrb[0].mxu0
  %v284 = vadd.f32 %v68, %v283
  %v285 = vpop.f32.mrb[0].mxu0
  %286 = vmatprep.mubr.bf16.mxu0 %v121
  %287 = vmatmul.mubr.bf16.gmra.mrb[0].mxu0 %v120
  %v288 = vpop.f32.mrb[0].mxu0
  %v289 = vadd.f32 %v68, %v288
  %v290 = vpop.f32.mrb[0].mxu0
  %v291 = vpop.f32.mrb[0].mxu0
  %v292 = vadd.f32 %v68, %v291
  %v293 = vpop.f32.mrb[0].mxu0
  %294 = vmatprep.mubr.bf16.mxu0 %v123
  %295 = vmatmul.mubr.bf16.gmra.mrb[0].mxu0 %v122
  %v296 = vpop.f32.mrb[0].mxu0
  %v297 = vadd.f32 %v68, %v296
  %v298 = vpop.f32.mrb[0].mxu0
  %v299 = vpop.f32.mrb[0].mxu0
  %v300 = vadd.f32 %v68, %v299
  %v301 = vpop.f32.mrb[0].mxu0
  %302 = vmatprep.mubr.bf16.mxu0 %v125
  %303 = vmatmul.mubr.bf16.gmra.mrb[0].mxu0 %v124
  %v304 = vpop.f32.mrb[0].mxu0
  %v305 = vadd.f32 %v68, %v304
  %v306 = vpop.f32.mrb[0].mxu0
  %v307 = vpop.f32.mrb[0].mxu0
  %v308 = vadd.f32 %v68, %v307
  %v309 = vpop.f32.mrb[0].mxu0
  %310 = vmatprep.mubr.bf16.mxu0 %v127
  %311 = vmatmul.mubr.bf16.gmra.mrb[0].mxu0 %v126
  %v312 = vpop.f32.mrb[0].mxu0
  %v313 = vadd.f32 %v68, %v312
  %v314 = vpop.f32.mrb[0].mxu0
  %v315 = vpop.f32.mrb[0].mxu0
  %v316 = vadd.f32 %v68, %v315
  %v317 = vpop.f32.mrb[0].mxu0
  %318 = vmatprep.mubr.bf16.mxu0 %v129
  %319 = vmatmul.mubr.bf16.gmra.mrb[0].mxu0 %v128
  %v320 = vpop.f32.mrb[0].mxu0
  %v321 = vadd.f32 %v68, %v320
  %v322 = vpop.f32.mrb[0].mxu0
  %v323 = vpop.f32.mrb[0].mxu0
  %v324 = vadd.f32 %v68, %v323
  %v325 = vpop.f32.mrb[0].mxu0
  %326 = vmatprep.mubr.bf16.mxu0 %v131
  %327 = vmatmul.mubr.bf16.gmra.mrb[0].mxu0 %v130
  %v328 = vpop.f32.mrb[0].mxu0
  %v329 = vadd.f32 %v68, %v328
  %v330 = vpop.f32.mrb[0].mxu0
  %v331 = vpop.f32.mrb[0].mxu0
  %v332 = vadd.f32 %v68, %v331
  %v333 = vpop.f32.mrb[0].mxu0
  %334 = vmatprep.mubr.bf16.mxu0 %v133
  %335 = vmatmul.mubr.bf16.gmra.mrb[0].mxu0 %v132
  %v336 = vpop.f32.mrb[0].mxu0
  %v337 = vadd.f32 %v68, %v336
  %v338 = vpop.f32.mrb[0].mxu0
  %v339 = vpop.f32.mrb[0].mxu0
  %v340 = vadd.f32 %v68, %v339
  %v341 = vpop.f32.mrb[0].mxu0
  %342 = vdwg.mxu0
  %v343 = vmax.f32 %v281, 0.0
  %v344 = vmax.f32 %v284, 0.0
  %v345 = vmax.f32 %v289, 0.0
  %v346 = vmax.f32 %v292, 0.0
  %v347 = vmax.f32 %v297, 0.0
  %v348 = vmax.f32 %v300, 0.0
  %v349 = vmax.f32 %v305, 0.0
  %v350 = vmax.f32 %v308, 0.0
  %v351 = vmax.f32 %v313, 0.0
  %v352 = vmax.f32 %v316, 0.0
  %v353 = vmax.f32 %v321, 0.0
  %v354 = vmax.f32 %v324, 0.0
  %v355 = vmax.f32 %v329, 0.0
  %v356 = vmax.f32 %v332, 0.0
  %v357 = vmax.f32 %v337, 0.0
  %v358 = vmax.f32 %v340, 0.0
  %v359 = vpack.c.bf16 %v344, %v343
  %v360 = vpack.c.bf16 %v346, %v345
  %v361 = vpack.c.bf16 %v348, %v347
  %v362 = vpack.c.bf16 %v350, %v349
  %v363 = vpack.c.bf16 %v352, %v351
  %v364 = vpack.c.bf16 %v354, %v353
  %v365 = vpack.c.bf16 %v356, %v355
  %v366 = vpack.c.bf16 %v358, %v357
  %v375 = vunpack.c.l.b16 %v359
  %v376 = vunpack.c.h.b16 %v359
  %v377 = vunpack.c.l.b16 %v360
  %v378 = vunpack.c.h.b16 %v360
  %v379 = vunpack.c.l.b16 %v361
  %v380 = vunpack.c.h.b16 %v361
  %v381 = vunpack.c.l.b16 %v362
  %v382 = vunpack.c.h.b16 %v362
  %v383 = vunpack.c.l.b16 %v363
  %v384 = vunpack.c.h.b16 %v363
  %v385 = vunpack.c.l.b16 %v364
  %v386 = vunpack.c.h.b16 %v364
  %v387 = vunpack.c.l.b16 %v365
  %v388 = vunpack.c.h.b16 %v365
  %v389 = vunpack.c.l.b16 %v366
  %v390 = vunpack.c.h.b16 %v366
  %v391 = vpack.c.b16 %v375, %v375
  %v392 = vpack.c.b16 %v376, %v376
  %v393 = vpack.c.b16 %v377, %v377
  %v394 = vpack.c.b16 %v378, %v378
  %v395 = vpack.c.b16 %v379, %v379
  %v396 = vpack.c.b16 %v380, %v380
  %v397 = vpack.c.b16 %v381, %v381
  %v398 = vpack.c.b16 %v382, %v382
  %v399 = vpack.c.b16 %v383, %v383
  %v400 = vpack.c.b16 %v384, %v384
  %v401 = vpack.c.b16 %v385, %v385
  %v402 = vpack.c.b16 %v386, %v386
  %v403 = vpack.c.b16 %v387, %v387
  %v404 = vpack.c.b16 %v388, %v388
  %v405 = vpack.c.b16 %v389, %v389
  %v406 = vpack.c.b16 %v390, %v390
  %vm423 = vcmask 257024
  %424 = vst.msk [vmem:[%s3] sm:$0xf] %vm423, %v391
  %425 = vst.msk [vmem:[%s3 + $0x4] sm:$0xf] %vm423, %v392
  %426 = vst.msk [vmem:[%s3 + $0x8] sm:$0xf] %vm423, %v393
  %427 = vst.msk [vmem:[%s3 + $0xc] sm:$0xf] %vm423, %v394
  %428 = vst.msk [vmem:[%s3 + $0x10] sm:$0xf] %vm423, %v395
  %429 = vst.msk [vmem:[%s3 + $0x14] sm:$0xf] %vm423, %v396
  %430 = vst.msk [vmem:[%s3 + $0x18] sm:$0xf] %vm423, %v397
  %431 = vst.msk [vmem:[%s3 + $0x1c] sm:$0xf] %vm423, %v398
  %432 = vst.msk [vmem:[%s3 + $0x20] sm:$0xf] %vm423, %v399
  %433 = vst.msk [vmem:[%s3 + $0x24] sm:$0xf] %vm423, %v400
  %434 = vst.msk [vmem:[%s3 + $0x28] sm:$0xf] %vm423, %v401
  %435 = vst.msk [vmem:[%s3 + $0x2c] sm:$0xf] %vm423, %v402
  %436 = vst.msk [vmem:[%s3 + $0x30] sm:$0xf] %vm423, %v403
  %437 = vst.msk [vmem:[%s3 + $0x34] sm:$0xf] %vm423, %v404
  %438 = vst.msk [vmem:[%s3 + $0x38] sm:$0xf] %vm423, %v405
  %439 = vst.msk [vmem:[%s3 + $0x3c] sm:$0xf] %vm423, %v406
  // Predicated region
  $region14: #{nature_trunk_forward.4} parent=0 // pred_check
    _
  $region15: #{nature_trunk_forward.4} parent=0 // pred_check_branch
    %441 = sbr.rel (0) target = $region17
  $region16: #{nature_trunk_forward.4} parent=0 // pred_region
    _
  $region17: #{nature_trunk_forward.4} parent=0 // pred_fallthru
    _
  // Predicated region
  $region18: #{nature_trunk_forward.4} parent=0 // pred_check
    _
  $region19: #{nature_trunk_forward.4} parent=0 // pred_check_branch
    %443 = sbr.rel (0) target = $region21
  $region20: #{nature_trunk_forward.4} parent=0 // pred_region
    _
  $region21: #{nature_trunk_forward.4} parent=0 // pred_fallthru
    _

// kernel: nature_trunk_forward.5
$region0: #{nature_trunk_forward.5}
  #allocation0 [shape = 'u32[]', space=smem, size = 0x4, offset = 0x4, fixed_abs, tag = 'smem constant byte address 0x4 - core index']
  #allocation1 [shape = 'u32[144,128]{1,0:T(1,128)}', space=vmem, size = 0x12000, scoped, tag = 'internal scratch']
  %s0 = inlined_call_operand.vmem [shape: bf16[18,512], index: 0, kind: input, shape index: {}]
  %s1 = inlined_call_operand.vmem [shape: bf16[512,64], index: 1, kind: input, shape index: {}]
  %s2 = inlined_call_operand.vmem [shape: f32[1,64], index: 2, kind: input, shape index: {}]
  %s3 = inlined_call_operand.vmem [shape: bf16[18,64], index: 3, kind: output, shape index: {}]
  %s4 = sld [smem:[#allocation0]]
  $region22: #{nature_trunk_forward.5} parent=0
    _
  %s6 = ssub.s32 1, %s4
  %s7 = scalar_select 0, %s6, %s4
  // Predicated region
  $region2: #{nature_trunk_forward.5} parent=0 // pred_check
    _
  $region3: #{nature_trunk_forward.5} parent=0 // pred_check_branch
    %9 = sbr.rel (0) target = $region5
  $region4: #{nature_trunk_forward.5} parent=0 // pred_region
    _
  $region5: #{nature_trunk_forward.5} parent=0 // pred_fallthru
    _
  // Predicated region
  $region6: #{nature_trunk_forward.5} parent=0 // pred_check
    _
  $region7: #{nature_trunk_forward.5} parent=0 // pred_check_branch
    %11 = sbr.rel (0) target = $region9
  $region8: #{nature_trunk_forward.5} parent=0 // pred_region
    _
  $region9: #{nature_trunk_forward.5} parent=0 // pred_fallthru
    _
  // Predicated region
  $region10: #{nature_trunk_forward.5} parent=0 // pred_check
    _
  $region11: #{nature_trunk_forward.5} parent=0 // pred_check_branch
    %13 = sbr.rel (0) target = $region13
  $region12: #{nature_trunk_forward.5} parent=0 // pred_region
    _
  $region13: #{nature_trunk_forward.5} parent=0 // pred_fallthru
    _
  %v15 = vld [vmem:[%s0] sm:$0xff]
  %v16 = vld [vmem:[%s0 + $0x8] sm:$0xff]
  %v17 = vld [vmem:[%s0 + $0x10] sm:$0xff]
  %v18 = vld [vmem:[%s0 + $0x18] sm:$0xff]
  %v19 = vld [vmem:[%s0 + $0x20] sm:$0x11]
  %v20 = vld [vmem:[%s0 + $0x28] sm:$0x11]
  %v21 = vld [vmem:[%s1] sm:$0xf]
  %v22 = vld [vmem:[%s1 + $0x4] sm:$0xf]
  %v23 = vld [vmem:[%s1 + $0x8] sm:$0xf]
  %v24 = vld [vmem:[%s1 + $0xc] sm:$0xf]
  %v25 = vld [vmem:[%s1 + $0x10] sm:$0xf]
  %v26 = vld [vmem:[%s1 + $0x14] sm:$0xf]
  %v27 = vld [vmem:[%s1 + $0x18] sm:$0xf]
  %v28 = vld [vmem:[%s1 + $0x1c] sm:$0xf]
  %v29 = vld [vmem:[%s1 + $0x20] sm:$0xf]
  %v30 = vld [vmem:[%s1 + $0x24] sm:$0xf]
  %v31 = vld [vmem:[%s1 + $0x28] sm:$0xf]
  %v32 = vld [vmem:[%s1 + $0x2c] sm:$0xf]
  %v33 = vld [vmem:[%s1 + $0x30] sm:$0xf]
  %v34 = vld [vmem:[%s1 + $0x34] sm:$0xf]
  %v35 = vld [vmem:[%s1 + $0x38] sm:$0xf]
  %v36 = vld [vmem:[%s1 + $0x3c] sm:$0xf]
  %v37 = vld [vmem:[%s1 + $0x40] sm:$0xf]
  %v38 = vld [vmem:[%s1 + $0x44] sm:$0xf]
  %v39 = vld [vmem:[%s1 + $0x48] sm:$0xf]
  %v40 = vld [vmem:[%s1 + $0x4c] sm:$0xf]
  %v41 = vld [vmem:[%s1 + $0x50] sm:$0xf]
  %v42 = vld [vmem:[%s1 + $0x54] sm:$0xf]
  %v43 = vld [vmem:[%s1 + $0x58] sm:$0xf]
  %v44 = vld [vmem:[%s1 + $0x5c] sm:$0xf]
  %v45 = vld [vmem:[%s1 + $0x60] sm:$0xf]
  %v46 = vld [vmem:[%s1 + $0x64] sm:$0xf]
  %v47 = vld [vmem:[%s1 + $0x68] sm:$0xf]
  %v48 = vld [vmem:[%s1 + $0x6c] sm:$0xf]
  %v49 = vld [vmem:[%s1 + $0x70] sm:$0xf]
  %v50 = vld [vmem:[%s1 + $0x74] sm:$0xf]
  %v51 = vld [vmem:[%s1 + $0x78] sm:$0xf]
  %v52 = vld [vmem:[%s1 + $0x7c] sm:$0xf]
  %v53 = vld [vmem:[%s1 + $0x80] sm:$0xf]
  %v54 = vld [vmem:[%s1 + $0x84] sm:$0xf]
  %v55 = vld [vmem:[%s1 + $0x88] sm:$0xf]
  %v56 = vld [vmem:[%s1 + $0x8c] sm:$0xf]
  %v57 = vld [vmem:[%s1 + $0x90] sm:$0xf]
  %v58 = vld [vmem:[%s1 + $0x94] sm:$0xf]
  %v59 = vld [vmem:[%s1 + $0x98] sm:$0xf]
  %v60 = vld [vmem:[%s1 + $0x9c] sm:$0xf]
  %v61 = vld [vmem:[%s1 + $0xa0] sm:$0xf]
  %v62 = vld [vmem:[%s1 + $0xa4] sm:$0xf]
  %v63 = vld [vmem:[%s1 + $0xa8] sm:$0xf]
  %v64 = vld [vmem:[%s1 + $0xac] sm:$0xf]
  %v65 = vld [vmem:[%s1 + $0xb0] sm:$0xf]
  %v66 = vld [vmem:[%s1 + $0xb4] sm:$0xf]
  %v67 = vld [vmem:[%s1 + $0xb8] sm:$0xf]
  %v68 = vld [vmem:[%s1 + $0xbc] sm:$0xf]
  %v69 = vld [vmem:[%s1 + $0xc0] sm:$0xf]
  %v70 = vld [vmem:[%s1 + $0xc4] sm:$0xf]
  %v71 = vld [vmem:[%s1 + $0xc8] sm:$0xf]
  %v72 = vld [vmem:[%s1 + $0xcc] sm:$0xf]
  %v73 = vld [vmem:[%s1 + $0xd0] sm:$0xf]
  %v74 = vld [vmem:[%s1 + $0xd4] sm:$0xf]
  %v75 = vld [vmem:[%s1 + $0xd8] sm:$0xf]
  %v76 = vld [vmem:[%s1 + $0xdc] sm:$0xf]
  %v77 = vld [vmem:[%s1 + $0xe0] sm:$0xf]
  %v78 = vld [vmem:[%s1 + $0xe4] sm:$0xf]
  %v79 = vld [vmem:[%s1 + $0xe8] sm:$0xf]
  %v80 = vld [vmem:[%s1 + $0xec] sm:$0xf]
  %v81 = vld [vmem:[%s1 + $0xf0] sm:$0xf]
  %v82 = vld [vmem:[%s1 + $0xf4] sm:$0xf]
  %v83 = vld [vmem:[%s1 + $0xf8] sm:$0xf]
  %v84 = vld [vmem:[%s1 + $0xfc] sm:$0xf]
  %v85 = vld [vmem:[%s2] sm:$0x1]
  %v87 = vlaneseq
  %v88 = vshrl.u32 %v87, 7
  %v89 = vsub.s32 0, %v88
  %v90 = vrot.slane %v85, %v89
  %v98 = vunpack.c.l.b16 %v15
  %v99 = vunpack.c.h.b16 %v15
  %v100 = vunpack.c.l.b16 %v16
  %v101 = vunpack.c.h.b16 %v16
  %v102 = vunpack.c.l.b16 %v17
  %v103 = vunpack.c.h.b16 %v17
  %v104 = vunpack.c.l.b16 %v18
  %v105 = vunpack.c.h.b16 %v18
  %v106 = vunpack.c.l.b16 %v19
  %v107 = vunpack.c.h.b16 %v19
  %v108 = vunpack.c.l.b16 %v20
  %v109 = vunpack.c.h.b16 %v20
  %v110 = vpack.c.b16 %v102, %v98
  %v111 = vpack.c.b16 %v103, %v99
  %v112 = vpack.c.b16 %v104, %v100
  %v113 = vpack.c.b16 %v105, %v101
  %v114 = vpack.c.b16 %v106, %v106
  %v115 = vpack.c.b16 %v107, %v107
  %v116 = vpack.c.b16 %v108, %v108
  %v117 = vpack.c.b16 %v109, %v109
  %v190 = vunpack.c.l.b16 %v21
  %v191 = vunpack.c.l.b16 %v22
  %v192 = vunpack.c.l.b16 %v23
  %v193 = vunpack.c.l.b16 %v24
  %v194 = vunpack.c.l.b16 %v25
  %v195 = vunpack.c.l.b16 %v26
  %v196 = vunpack.c.l.b16 %v27
  %v197 = vunpack.c.l.b16 %v28
  %v198 = vunpack.c.l.b16 %v29
  %v199 = vunpack.c.l.b16 %v30
  %v200 = vunpack.c.l.b16 %v31
  %v201 = vunpack.c.l.b16 %v32
  %v202 = vunpack.c.l.b16 %v33
  %v203 = vunpack.c.l.b16 %v34
  %v204 = vunpack.c.l.b16 %v35
  %v205 = vunpack.c.l.b16 %v36
  %v206 = vunpack.c.l.b16 %v37
  %v207 = vunpack.c.l.b16 %v38
  %v208 = vunpack.c.l.b16 %v39
  %v209 = vunpack.c.l.b16 %v40
  %v210 = vunpack.c.l.b16 %v41
  %v211 = vunpack.c.l.b16 %v42
  %v212 = vunpack.c.l.b16 %v43
  %v213 = vunpack.c.l.b16 %v44
  %v214 = vunpack.c.l.b16 %v45
  %v215 = vunpack.c.l.b16 %v46
  %v216 = vunpack.c.l.b16 %v47
  %v217 = vunpack.c.l.b16 %v48
  %v218 = vunpack.c.l.b16 %v49
  %v219 = vunpack.c.l.b16 %v50
  %v220 = vunpack.c.l.b16 %v51
  %v221 = vunpack.c.l.b16 %v52
  %v222 = vunpack.c.l.b16 %v53
  %v223 = vunpack.c.l.b16 %v54
  %v224 = vunpack.c.l.b16 %v55
  %v225 = vunpack.c.l.b16 %v56
  %v226 = vunpack.c.l.b16 %v57
  %v227 = vunpack.c.l.b16 %v58
  %v228 = vunpack.c.l.b16 %v59
  %v229 = vunpack.c.l.b16 %v60
  %v230 = vunpack.c.l.b16 %v61
  %v231 = vunpack.c.l.b16 %v62
  %v232 = vunpack.c.l.b16 %v63
  %v233 = vunpack.c.l.b16 %v64
  %v234 = vunpack.c.l.b16 %v65
  %v235 = vunpack.c.l.b16 %v66
  %v236 = vunpack.c.l.b16 %v67
  %v237 = vunpack.c.l.b16 %v68
  %v238 = vunpack.c.l.b16 %v69
  %v239 = vunpack.c.l.b16 %v70
  %v240 = vunpack.c.l.b16 %v71
  %v241 = vunpack.c.l.b16 %v72
  %v242 = vunpack.c.l.b16 %v73
  %v243 = vunpack.c.l.b16 %v74
  %v244 = vunpack.c.l.b16 %v75
  %v245 = vunpack.c.l.b16 %v76
  %v246 = vunpack.c.l.b16 %v77
  %v247 = vunpack.c.l.b16 %v78
  %v248 = vunpack.c.l.b16 %v79
  %v249 = vunpack.c.l.b16 %v80
  %v250 = vunpack.c.l.b16 %v81
  %v251 = vunpack.c.l.b16 %v82
  %v252 = vunpack.c.l.b16 %v83
  %v253 = vunpack.c.l.b16 %v84
  %v254 = vpack.c.b16 %v191, %v190
  %v255 = vpack.c.b16 %v193, %v192
  %v256 = vpack.c.b16 %v195, %v194
  %v257 = vpack.c.b16 %v197, %v196
  %v258 = vpack.c.b16 %v199, %v198
  %v259 = vpack.c.b16 %v201, %v200
  %v260 = vpack.c.b16 %v203, %v202
  %v261 = vpack.c.b16 %v205, %v204
  %v262 = vpack.c.b16 %v207, %v206
  %v263 = vpack.c.b16 %v209, %v208
  %v264 = vpack.c.b16 %v211, %v210
  %v265 = vpack.c.b16 %v213, %v212
  %v266 = vpack.c.b16 %v215, %v214
  %v267 = vpack.c.b16 %v217, %v216
  %v268 = vpack.c.b16 %v219, %v218
  %v269 = vpack.c.b16 %v221, %v220
  %v270 = vpack.c.b16 %v223, %v222
  %v271 = vpack.c.b16 %v225, %v224
  %v272 = vpack.c.b16 %v227, %v226
  %v273 = vpack.c.b16 %v229, %v228
  %v274 = vpack.c.b16 %v231, %v230
  %v275 = vpack.c.b16 %v233, %v232
  %v276 = vpack.c.b16 %v235, %v234
  %v277 = vpack.c.b16 %v237, %v236
  %v278 = vpack.c.b16 %v239, %v238
  %v279 = vpack.c.b16 %v241, %v240
  %v280 = vpack.c.b16 %v243, %v242
  %v281 = vpack.c.b16 %v245, %v244
  %v282 = vpack.c.b16 %v247, %v246
  %v283 = vpack.c.b16 %v249, %v248
  %v284 = vpack.c.b16 %v251, %v250
  %v285 = vpack.c.b16 %v253, %v252
  %318 = vmatprep.subr.bf16.mxu0 0
  %319 = vmatpush1.bf16.msra.mxu0 %v254
  %320 = vmatprep.subr.bf16.mxu0 0
  %321 = vmatpush1.bf16.msra.mxu0 %v255
  %322 = vmatprep.subr.bf16.mxu0 0
  %323 = vmatpush1.bf16.msra.mxu0 %v256
  %324 = vmatprep.subr.bf16.mxu0 0
  %325 = vmatpush1.bf16.msra.mxu0 %v257
  %326 = vmatprep.subr.bf16.mxu0 0
  %327 = vmatpush1.bf16.msra.mxu0 %v258
  %328 = vmatprep.subr.bf16.mxu0 0
  %329 = vmatpush1.bf16.msra.mxu0 %v259
  %330 = vmatprep.subr.bf16.mxu0 0
  %331 = vmatpush1.bf16.msra.mxu0 %v260
  %332 = vmatprep.subr.bf16.mxu0 0
  %333 = vmatpush1.bf16.msra.mxu0 %v261
  %334 = vmatprep.subr.bf16.mxu0 0
  %335 = vmatpush1.bf16.msra.mxu0 %v262
  %336 = vmatprep.subr.bf16.mxu0 0
  %337 = vmatpush1.bf16.msra.mxu0 %v263
  %338 = vmatprep.subr.bf16.mxu0 0
  %339 = vmatpush1.bf16.msra.mxu0 %v264
  %340 = vmatprep.subr.bf16.mxu0 0
  %341 = vmatpush1.bf16.msra.mxu0 %v265
  %342 = vmatprep.subr.bf16.mxu0 0
  %343 = vmatpush1.bf16.msra.mxu0 %v266
  %344 = vmatprep.subr.bf16.mxu0 0
  %345 = vmatpush1.bf16.msra.mxu0 %v267
  %346 = vmatprep.subr.bf16.mxu0 0
  %347 = vmatpush1.bf16.msra.mxu0 %v268
  %348 = vmatprep.subr.bf16.mxu0 0
  %349 = vmatpush1.bf16.msra.mxu0 %v269
  %350 = vmatprep.mubr.bf16.mxu0 %v111
  %351 = vmatmul.mubr.bf16.gmra.mrb[0].mxu0 %v110
  %v352 = vpop.f32.mrb[0].mxu0
  %v353 = vadd.f32 %v90, %v352
  %v354 = vpop.f32.mrb[0].mxu0
  %v355 = vpop.f32.mrb[0].mxu0
  %v356 = vadd.f32 %v90, %v355
  %v357 = vpop.f32.mrb[0].mxu0
  %358 = vmatprep.mubr.bf16.mxu0 %v115
  %359 = vmatmul.mubr.bf16.gmra.mrb[0].mxu0 %v114
  %v360 = vpop.f32.mrb[0].mxu0
  %v361 = vadd.f32 %v90, %v360
  %v362 = vpop.f32.mrb[0].mxu0
  %v363 = vpop.f32.mrb[0].mxu0
  %v364 = vpop.f32.mrb[0].mxu0
  %365 = vdwg.mxu0
  %366 = vmatprep.subr.bf16.mxu0 0
  %367 = vmatpush1.bf16.msra.mxu0 %v270
  %368 = vmatprep.subr.bf16.mxu0 0
  %369 = vmatpush1.bf16.msra.mxu0 %v271
  %370 = vmatprep.subr.bf16.mxu0 0
  %371 = vmatpush1.bf16.msra.mxu0 %v272
  %372 = vmatprep.subr.bf16.mxu0 0
  %373 = vmatpush1.bf16.msra.mxu0 %v273
  %374 = vmatprep.subr.bf16.mxu0 0
  %375 = vmatpush1.bf16.msra.mxu0 %v274
  %376 = vmatprep.subr.bf16.mxu0 0
  %377 = vmatpush1.bf16.msra.mxu0 %v275
  %378 = vmatprep.subr.bf16.mxu0 0
  %379 = vmatpush1.bf16.msra.mxu0 %v276
  %380 = vmatprep.subr.bf16.mxu0 0
  %381 = vmatpush1.bf16.msra.mxu0 %v277
  %382 = vmatprep.subr.bf16.mxu0 0
  %383 = vmatpush1.bf16.msra.mxu0 %v278
  %384 = vmatprep.subr.bf16.mxu0 0
  %385 = vmatpush1.bf16.msra.mxu0 %v279
  %386 = vmatprep.subr.bf16.mxu0 0
  %387 = vmatpush1.bf16.msra.mxu0 %v280
  %388 = vmatprep.subr.bf16.mxu0 0
  %389 = vmatpush1.bf16.msra.mxu0 %v281
  %390 = vmatprep.subr.bf16.mxu0 0
  %391 = vmatpush1.bf16.msra.mxu0 %v282
  %392 = vmatprep.subr.bf16.mxu0 0
  %393 = vmatpush1.bf16.msra.mxu0 %v283
  %394 = vmatprep.subr.bf16.mxu0 0
  %395 = vmatpush1.bf16.msra.mxu0 %v284
  %396 = vmatprep.subr.bf16.mxu0 0
  %397 = vmatpush1.bf16.msra.mxu0 %v285
  %398 = vmatprep.mubr.bf16.mxu0 %v113
  %399 = vmatmul.mubr.bf16.gmra.mrb[0].mxu0 %v112
  %v400 = vpop.f32.mrb[0].mxu0
  %v401 = vadd.f32 %v353, %v400
  %v402 = vpop.f32.mrb[0].mxu0
  %v403 = vpop.f32.mrb[0].mxu0
  %v404 = vadd.f32 %v356, %v403
  %v405 = vpop.f32.mrb[0].mxu0
  %406 = vmatprep.mubr.bf16.mxu0 %v117
  %407 = vmatmul.mubr.bf16.gmra.mrb[0].mxu0 %v116
  %v408 = vpop.f32.mrb[0].mxu0
  %v409 = vadd.f32 %v361, %v408
  %v410 = vpop.f32.mrb[0].mxu0
  %v411 = vpop.f32.mrb[0].mxu0
  %v412 = vpop.f32.mrb[0].mxu0
  %413 = vdwg.mxu0
  %v414 = vmax.f32 %v401, 0.0
  %v415 = vmax.f32 %v404, 0.0
  %v416 = vmax.f32 %v409, 0.0
  %v417 = vpack.c.bf16 %v415, %v414
  %v418 = vpack.c.bf16 %v416, %v416
  %v421 = vunpack.c.l.b16 %v417
  %v422 = vunpack.c.h.b16 %v417
  %v423 = vunpack.c.l.b16 %v418
  %v424 = vpack.c.b16 %v421, %v421
  %v425 = vpack.c.b16 %v422, %v422
  %v426 = vpack.c.b16 %v423, %v423
  %vm430 = vcmask 519168
  %431 = vst.msk [vmem:[%s3] sm:$0xf] %vm430, %v424
  %432 = vst.msk [vmem:[%s3 + $0x4] sm:$0xf] %vm430, %v425
  %vm433 = vcmask 516096
  %434 = vst.msk [vmem:[%s3 + $0x8] sm:$0x1] %vm433, %v426
  // Predicated region
  $region14: #{nature_trunk_forward.5} parent=0 // pred_check
    _
  $region15: #{nature_trunk_forward.5} parent=0 // pred_check_branch
    %436 = sbr.rel (0) target = $region17
  $region16: #{nature_trunk_forward.5} parent=0 // pred_region
    _
  $region17: #{nature_trunk_forward.5} parent=0 // pred_fallthru
    _
  // Predicated region
  $region18: #{nature_trunk_forward.5} parent=0 // pred_check
    _
  $region19: #{nature_trunk_forward.5} parent=0 // pred_check_branch
    %438 = sbr.rel (0) target = $region21
  $region20: #{nature_trunk_forward.5} parent=0 // pred_region
    _
  $region21: #{nature_trunk_forward.5} parent=0 // pred_fallthru
    _

// kernel: nature_trunk_forward.7
$region0: #{nature_trunk_forward.7}
  #allocation0 [shape = 'u32[]', space=smem, size = 0x4, offset = 0x4, fixed_abs, tag = 'smem constant byte address 0x4 - core index']
  #allocation1 [shape = 'u32[144,128]{1,0:T(1,128)}', space=vmem, size = 0x12000, scoped, tag = 'internal scratch']
  %s0 = inlined_call_operand.vmem [shape: bf16[2,64], index: 0, kind: input, shape index: {}]
  %s1 = inlined_call_operand.vmem [shape: bf16[64,512], index: 1, kind: input, shape index: {}]
  %s2 = inlined_call_operand.vmem [shape: f32[1,512], index: 2, kind: input, shape index: {}]
  %s3 = inlined_call_operand.hbm [shape: f32[2,512], index: 3, kind: output, shape index: {}]
  %s4 = sld [smem:[#allocation0]]
  $region22: #{nature_trunk_forward.7} parent=0
    _
  %s6 = ssub.s32 1, %s4
  %s7 = scalar_select 0, %s6, %s4
  $region1: #{nature_trunk_forward.7} parent=0
    #allocation2 [shape = 'u8[4096]{0}', space=vmem, size = 0x1000, scoped, tag = 'output window, operand 0, single buffered']
    #allocation3 [shape = 's32[1]{0}', space=sflag, size = 0x4, scoped, tag = 'scoped memory for nature_trunk_forward.7']
    %8 = vsyncpa [#allocation3], 0
    // Predicated region
    $region2: #{nature_trunk_forward.7} parent=1 // pred_check
      _
    $region3: #{nature_trunk_forward.7} parent=1 // pred_check_branch
      %10 = sbr.rel (0) target = $region5
    $region4: #{nature_trunk_forward.7} parent=1 // pred_region
      _
    $region5: #{nature_trunk_forward.7} parent=1 // pred_fallthru
      _
    // Predicated region
    $region6: #{nature_trunk_forward.7} parent=1 // pred_check
      _
    $region7: #{nature_trunk_forward.7} parent=1 // pred_check_branch
      %12 = sbr.rel (0) target = $region9
    $region8: #{nature_trunk_forward.7} parent=1 // pred_region
      _
    $region9: #{nature_trunk_forward.7} parent=1 // pred_fallthru
      _
    // Predicated region
    $region10: #{nature_trunk_forward.7} parent=1 // pred_check
      _
    $region11: #{nature_trunk_forward.7} parent=1 // pred_check_branch
      %14 = sbr.rel (0) target = $region13
    $region12: #{nature_trunk_forward.7} parent=1 // pred_region
      _
    $region13: #{nature_trunk_forward.7} parent=1 // pred_fallthru
      _
    %v16 = vld [vmem:[%s0] sm:$0x1]
    %v17 = vld [vmem:[%s1] sm:$0xff]
    %v18 = vld [vmem:[%s1 + $0x8] sm:$0xff]
    %v19 = vld [vmem:[%s1 + $0x10] sm:$0xff]
    %v20 = vld [vmem:[%s1 + $0x18] sm:$0xff]
    %v21 = vld [vmem:[%s1 + $0x20] sm:$0xff]
    %v22 = vld [vmem:[%s1 + $0x28] sm:$0xff]
    %v23 = vld [vmem:[%s1 + $0x30] sm:$0xff]
    %v24 = vld [vmem:[%s1 + $0x38] sm:$0xff]
    %v25 = vld [vmem:[%s1 + $0x40] sm:$0xff]
    %v26 = vld [vmem:[%s1 + $0x48] sm:$0xff]
    %v27 = vld [vmem:[%s1 + $0x50] sm:$0xff]
    %v28 = vld [vmem:[%s1 + $0x58] sm:$0xff]
    %v29 = vld [vmem:[%s1 + $0x60] sm:$0xff]
    %v30 = vld [vmem:[%s1 + $0x68] sm:$0xff]
    %v31 = vld [vmem:[%s1 + $0x70] sm:$0xff]
    %v32 = vld [vmem:[%s1 + $0x78] sm:$0xff]
    %v33 = vld [vmem:[%s2] sm:$0xf]
    %v35 = vlaneseq
    %v36 = vshrl.u32 %v35, 7
    %v37 = vsub.s32 0, %v36
    %v38 = vrot.slane %v33, %v37
    %v39 = vlaneseq
    %v40 = vshrl.u32 %v39, 7
    %v41 = vsub.s32 1, %v40
    %v42 = vrot.slane %v33, %v41
    %v43 = vlaneseq
    %v44 = vshrl.u32 %v43, 7
    %v45 = vsub.s32 2, %v44
    %v46 = vrot.slane %v33, %v45
    %v47 = vlaneseq
    %v48 = vshrl.u32 %v47, 7
    %v49 = vsub.s32 3, %v48
    %v50 = vrot.slane %v33, %v49
    %v71 = vunpack.c.l.b16 %v17
    %v72 = vunpack.c.h.b16 %v17
    %v73 = vunpack.c.l.b16 %v18
    %v74 = vunpack.c.h.b16 %v18
    %v75 = vunpack.c.l.b16 %v19
    %v76 = vunpack.c.h.b16 %v19
    %v77 = vunpack.c.l.b16 %v20
    %v78 = vunpack.c.h.b16 %v20
    %v79 = vunpack.c.l.b16 %v21
    %v80 = vunpack.c.h.b16 %v21
    %v81 = vunpack.c.l.b16 %v22
    %v82 = vunpack.c.h.b16 %v22
    %v83 = vunpack.c.l.b16 %v23
    %v84 = vunpack.c.h.b16 %v23
    %v85 = vunpack.c.l.b16 %v24
    %v86 = vunpack.c.h.b16 %v24
    %v87 = vunpack.c.l.b16 %v25
    %v88 = vunpack.c.h.b16 %v25
    %v89 = vunpack.c.l.b16 %v26
    %v90 = vunpack.c.h.b16 %v26
    %v91 = vunpack.c.l.b16 %v27
    %v92 = vunpack.c.h.b16 %v27
    %v93 = vunpack.c.l.b16 %v28
    %v94 = vunpack.c.h.b16 %v28
    %v95 = vunpack.c.l.b16 %v29
    %v96 = vunpack.c.h.b16 %v29
    %v97 = vunpack.c.l.b16 %v30
    %v98 = vunpack.c.h.b16 %v30
    %v99 = vunpack.c.l.b16 %v31
    %v100 = vunpack.c.h.b16 %v31
    %v101 = vunpack.c.l.b16 %v32
    %v102 = vunpack.c.h.b16 %v32
    %v103 = vpack.c.b16 %v75, %v71
    %v104 = vpack.c.b16 %v76, %v72
    %v105 = vpack.c.b16 %v77, %v73
    %v106 = vpack.c.b16 %v78, %v74
    %v107 = vpack.c.b16 %v83, %v79
    %v108 = vpack.c.b16 %v84, %v80
    %v109 = vpack.c.b16 %v85, %v81
    %v110 = vpack.c.b16 %v86, %v82
    %v111 = vpack.c.b16 %v91, %v87
    %v112 = vpack.c.b16 %v92, %v88
    %v113 = vpack.c.b16 %v93, %v89
    %v114 = vpack.c.b16 %v94, %v90
    %v115 = vpack.c.b16 %v99, %v95
    %v116 = vpack.c.b16 %v100, %v96
    %v117 = vpack.c.b16 %v101, %v97
    %v118 = vpack.c.b16 %v102, %v98
    %vm135 = vcmask 523264
    %v137 = vsel %vm135, %v16, 0
    %139 = vmatprep.subr.bf16.mxu0 %v104
    %140 = vmatpush1.bf16.msra.mxu0 %v103
    %141 = vmatprep.subr.bf16.mxu0 %v108
    %142 = vmatpush1.bf16.msra.mxu0 %v107
    %143 = vmatprep.subr.bf16.mxu0 %v112
    %144 = vmatpush1.bf16.msra.mxu0 %v111
    %145 = vmatprep.subr.bf16.mxu0 %v116
    %146 = vmatpush1.bf16.msra.mxu0 %v115
    %147 = vmatprep.subr.bf16.mxu0 0
    %148 = vmatpush1.bf16.msra.mxu0 0
    %149 = vmatprep.subr.bf16.mxu0 0
    %150 = vmatpush1.bf16.msra.mxu0 0
    %151 = vmatprep.subr.bf16.mxu0 0
    %152 = vmatpush1.bf16.msra.mxu0 0
    %153 = vmatprep.subr.bf16.mxu0 0
    %154 = vmatpush1.bf16.msra.mxu0 0
    %155 = vmatprep.subr.bf16.mxu0 0
    %156 = vmatpush1.bf16.msra.mxu0 0
    %157 = vmatprep.subr.bf16.mxu0 0
    %158 = vmatpush1.bf16.msra.mxu0 0
    %159 = vmatprep.subr.bf16.mxu0 0
    %160 = vmatpush1.bf16.msra.mxu0 0
    %161 = vmatprep.subr.bf16.mxu0 0
    %162 = vmatpush1.bf16.msra.mxu0 0
    %163 = vmatprep.subr.bf16.mxu0 0
    %164 = vmatpush1.bf16.msra.mxu0 0
    %165 = vmatprep.subr.bf16.mxu0 0
    %166 = vmatpush1.bf16.msra.mxu0 0
    %167 = vmatprep.subr.bf16.mxu0 0
    %168 = vmatpush1.bf16.msra.mxu0 0
    %169 = vmatprep.subr.bf16.mxu0 0
    %170 = vmatpush1.bf16.msra.mxu0 0
    %171 = vmatprep.mubr.bf16.mxu0 0
    %172 = vmatmul.mubr.bf16.gmra.mrb[0].mxu0 %v137
    %v173 = vpop.f32.mrb[0].mxu0
    %v174 = vadd.f32 %v38, %v173
    %v175 = vpop.f32.mrb[0].mxu0
    %v176 = vadd.f32 %v42, %v175
    %v177 = vpop.f32.mrb[0].mxu0
    %v178 = vpop.f32.mrb[0].mxu0
    %179 = vdwg.mxu0
    %180 = vmatprep.subr.bf16.mxu0 %v106
    %181 = vmatpush1.bf16.msra.mxu0 %v105
    %182 = vmatprep.subr.bf16.mxu0 %v110
    %183 = vmatpush1.bf16.msra.mxu0 %v109
    %184 = vmatprep.subr.bf16.mxu0 %v114
    %185 = vmatpush1.bf16.msra.mxu0 %v113
    %186 = vmatprep.subr.bf16.mxu0 %v118
    %187 = vmatpush1.bf16.msra.mxu0 %v117
    %188 = vmatprep.subr.bf16.mxu0 0
    %189 = vmatpush1.bf16.msra.mxu0 0
    %190 = vmatprep.subr.bf16.mxu0 0
    %191 = vmatpush1.bf16.msra.mxu0 0
    %192 = vmatprep.subr.bf16.mxu0 0
    %193 = vmatpush1.bf16.msra.mxu0 0
    %194 = vmatprep.subr.bf16.mxu0 0
    %195 = vmatpush1.bf16.msra.mxu0 0
    %196 = vmatprep.subr.bf16.mxu0 0
    %197 = vmatpush1.bf16.msra.mxu0 0
    %198 = vmatprep.subr.bf16.mxu0 0
    %199 = vmatpush1.bf16.msra.mxu0 0
    %200 = vmatprep.subr.bf16.mxu0 0
    %201 = vmatpush1.bf16.msra.mxu0 0
    %202 = vmatprep.subr.bf16.mxu0 0
    %203 = vmatpush1.bf16.msra.mxu0 0
    %204 = vmatprep.subr.bf16.mxu0 0
    %205 = vmatpush1.bf16.msra.mxu0 0
    %206 = vmatprep.subr.bf16.mxu0 0
    %207 = vmatpush1.bf16.msra.mxu0 0
    %208 = vmatprep.subr.bf16.mxu0 0
    %209 = vmatpush1.bf16.msra.mxu0 0
    %210 = vmatprep.subr.bf16.mxu0 0
    %211 = vmatpush1.bf16.msra.mxu0 0
    %212 = vmatprep.mubr.bf16.mxu0 0
    %213 = vmatmul.mubr.bf16.gmra.mrb[0].mxu0 %v137
    %v214 = vpop.f32.mrb[0].mxu0
    %v215 = vadd.f32 %v46, %v214
    %v216 = vpop.f32.mrb[0].mxu0
    %v217 = vadd.f32 %v50, %v216
    %v218 = vpop.f32.mrb[0].mxu0
    %v219 = vpop.f32.mrb[0].mxu0
    %220 = vdwg.mxu0
    %v221 = vmax.f32 %v174, 0.0
    %v222 = vmax.f32 %v176, 0.0
    %v223 = vmax.f32 %v215, 0.0
    %v224 = vmax.f32 %v217, 0.0
    %v229 = vcombine.low %v221, %v222
    %v230 = vcombine.low %v223, %v224
    %v232 = vunpack.c.l.s4 1983009808
    %v233 = vunpack.c.0.s8 %v232
    %v234 = vlaneseq
    %v235 = vshrl.u32 %v234, 7
    %v236 = vsub.s32 %v233, %v235
    %v237 = vrot.slane %v229, %v236
    %v239 = vunpack.c.l.s4 1983009808
    %v240 = vunpack.c.0.s8 %v239
    %v241 = vlaneseq
    %v242 = vshrl.u32 %v241, 7
    %v243 = vsub.s32 %v240, %v242
    %v244 = vrot.slane %v230, %v243
    %v245 = vcombine.low %v237, %v244
    %247 = vst [vmem:[#allocation2] sm:$0xff] %v245
    // Predicated region
    $region14: #{nature_trunk_forward.7} parent=1 // pred_check
      _
    $region15: #{nature_trunk_forward.7} parent=1 // pred_check_branch
      %249 = sbr.rel (0) target = $region17
    $region16: #{nature_trunk_forward.7} parent=1 // pred_region
      %s251 = ssub.s32 128, 128
      %252 = vsyncadd [#allocation3], %s251
      %s254 = sshll.u32 [#allocation2], 4
      %s255 = int_to_ptr.vmem [resolvable:$true] %s254
      %257 = dma.vmem_to_hbm [thread:$0]  %s255, 128, %s3, [#allocation3]
    $region17: #{nature_trunk_forward.7} parent=1 // pred_fallthru
      _
    // Predicated region
    $region18: #{nature_trunk_forward.7} parent=1 // pred_check
      _
    $region19: #{nature_trunk_forward.7} parent=1 // pred_check_branch
      %259 = sbr.rel (0) target = $region21
    $region20: #{nature_trunk_forward.7} parent=1 // pred_region
      %260 = dma.done [#allocation3], 128
    $region21: #{nature_trunk_forward.7} parent=1 // pred_fallthru
      _
    %261 = vsyncpa [#allocation3], 1

// kernel: nature_trunk_forward.6
$region0: #{nature_trunk_forward.6}
  #allocation0 [shape = 'u32[]', space=smem, size = 0x4, offset = 0x4, fixed_abs, tag = 'smem constant byte address 0x4 - core index']
  #allocation1 [shape = 'u32[144,128]{1,0:T(1,128)}', space=vmem, size = 0x12000, scoped, tag = 'internal scratch']
  %s0 = inlined_call_operand.vmem [shape: bf16[2,576], index: 0, kind: input, shape index: {}]
  %s1 = inlined_call_operand.vmem [shape: bf16[576,64], index: 1, kind: input, shape index: {}]
  %s2 = inlined_call_operand.vmem [shape: f32[1,64], index: 2, kind: input, shape index: {}]
  %s3 = inlined_call_operand.vmem [shape: bf16[2,64], index: 3, kind: output, shape index: {}]
  %s4 = sld [smem:[#allocation0]]
  $region22: #{nature_trunk_forward.6} parent=0
    _
  %s6 = ssub.s32 1, %s4
  %s7 = scalar_select 0, %s6, %s4
  // Predicated region
  $region2: #{nature_trunk_forward.6} parent=0 // pred_check
    _
  $region3: #{nature_trunk_forward.6} parent=0 // pred_check_branch
    %9 = sbr.rel (0) target = $region5
  $region4: #{nature_trunk_forward.6} parent=0 // pred_region
    _
  $region5: #{nature_trunk_forward.6} parent=0 // pred_fallthru
    _
  // Predicated region
  $region6: #{nature_trunk_forward.6} parent=0 // pred_check
    _
  $region7: #{nature_trunk_forward.6} parent=0 // pred_check_branch
    %11 = sbr.rel (0) target = $region9
  $region8: #{nature_trunk_forward.6} parent=0 // pred_region
    _
  $region9: #{nature_trunk_forward.6} parent=0 // pred_fallthru
    _
  // Predicated region
  $region10: #{nature_trunk_forward.6} parent=0 // pred_check
    _
  $region11: #{nature_trunk_forward.6} parent=0 // pred_check_branch
    %13 = sbr.rel (0) target = $region13
  $region12: #{nature_trunk_forward.6} parent=0 // pred_region
    _
  $region13: #{nature_trunk_forward.6} parent=0 // pred_fallthru
    _
  %v15 = vld [vmem:[%s0] sm:$0x1f]
  %v16 = vld [vmem:[%s1] sm:$0xf]
  %v17 = vld [vmem:[%s1 + $0x4] sm:$0xf]
  %v18 = vld [vmem:[%s1 + $0x8] sm:$0xf]
  %v19 = vld [vmem:[%s1 + $0xc] sm:$0xf]
  %v20 = vld [vmem:[%s1 + $0x10] sm:$0xf]
  %v21 = vld [vmem:[%s1 + $0x14] sm:$0xf]
  %v22 = vld [vmem:[%s1 + $0x18] sm:$0xf]
  %v23 = vld [vmem:[%s1 + $0x1c] sm:$0xf]
  %v24 = vld [vmem:[%s1 + $0x20] sm:$0xf]
  %v25 = vld [vmem:[%s1 + $0x24] sm:$0xf]
  %v26 = vld [vmem:[%s1 + $0x28] sm:$0xf]
  %v27 = vld [vmem:[%s1 + $0x2c] sm:$0xf]
  %v28 = vld [vmem:[%s1 + $0x30] sm:$0xf]
  %v29 = vld [vmem:[%s1 + $0x34] sm:$0xf]
  %v30 = vld [vmem:[%s1 + $0x38] sm:$0xf]
  %v31 = vld [vmem:[%s1 + $0x3c] sm:$0xf]
  %v32 = vld [vmem:[%s1 + $0x40] sm:$0xf]
  %v33 = vld [vmem:[%s1 + $0x44] sm:$0xf]
  %v34 = vld [vmem:[%s1 + $0x48] sm:$0xf]
  %v35 = vld [vmem:[%s1 + $0x4c] sm:$0xf]
  %v36 = vld [vmem:[%s1 + $0x50] sm:$0xf]
  %v37 = vld [vmem:[%s1 + $0x54] sm:$0xf]
  %v38 = vld [vmem:[%s1 + $0x58] sm:$0xf]
  %v39 = vld [vmem:[%s1 + $0x5c] sm:$0xf]
  %v40 = vld [vmem:[%s1 + $0x60] sm:$0xf]
  %v41 = vld [vmem:[%s1 + $0x64] sm:$0xf]
  %v42 = vld [vmem:[%s1 + $0x68] sm:$0xf]
  %v43 = vld [vmem:[%s1 + $0x6c] sm:$0xf]
  %v44 = vld [vmem:[%s1 + $0x70] sm:$0xf]
  %v45 = vld [vmem:[%s1 + $0x74] sm:$0xf]
  %v46 = vld [vmem:[%s1 + $0x78] sm:$0xf]
  %v47 = vld [vmem:[%s1 + $0x7c] sm:$0xf]
  %v48 = vld [vmem:[%s1 + $0x80] sm:$0xf]
  %v49 = vld [vmem:[%s1 + $0x84] sm:$0xf]
  %v50 = vld [vmem:[%s1 + $0x88] sm:$0xf]
  %v51 = vld [vmem:[%s1 + $0x8c] sm:$0xf]
  %v52 = vld [vmem:[%s1 + $0x90] sm:$0xf]
  %v53 = vld [vmem:[%s1 + $0x94] sm:$0xf]
  %v54 = vld [vmem:[%s1 + $0x98] sm:$0xf]
  %v55 = vld [vmem:[%s1 + $0x9c] sm:$0xf]
  %v56 = vld [vmem:[%s1 + $0xa0] sm:$0xf]
  %v57 = vld [vmem:[%s1 + $0xa4] sm:$0xf]
  %v58 = vld [vmem:[%s1 + $0xa8] sm:$0xf]
  %v59 = vld [vmem:[%s1 + $0xac] sm:$0xf]
  %v60 = vld [vmem:[%s1 + $0xb0] sm:$0xf]
  %v61 = vld [vmem:[%s1 + $0xb4] sm:$0xf]
  %v62 = vld [vmem:[%s1 + $0xb8] sm:$0xf]
  %v63 = vld [vmem:[%s1 + $0xbc] sm:$0xf]
  %v64 = vld [vmem:[%s1 + $0xc0] sm:$0xf]
  %v65 = vld [vmem:[%s1 + $0xc4] sm:$0xf]
  %v66 = vld [vmem:[%s1 + $0xc8] sm:$0xf]
  %v67 = vld [vmem:[%s1 + $0xcc] sm:$0xf]
  %v68 = vld [vmem:[%s1 + $0xd0] sm:$0xf]
  %v69 = vld [vmem:[%s1 + $0xd4] sm:$0xf]
  %v70 = vld [vmem:[%s1 + $0xd8] sm:$0xf]
  %v71 = vld [vmem:[%s1 + $0xdc] sm:$0xf]
  %v72 = vld [vmem:[%s1 + $0xe0] sm:$0xf]
  %v73 = vld [vmem:[%s1 + $0xe4] sm:$0xf]
  %v74 = vld [vmem:[%s1 + $0xe8] sm:$0xf]
  %v75 = vld [vmem:[%s1 + $0xec] sm:$0xf]
  %v76 = vld [vmem:[%s1 + $0xf0] sm:$0xf]
  %v77 = vld [vmem:[%s1 + $0xf4] sm:$0xf]
  %v78 = vld [vmem:[%s1 + $0xf8] sm:$0xf]
  %v79 = vld [vmem:[%s1 + $0xfc] sm:$0xf]
  %v80 = vld [vmem:[%s1 + $0x100] sm:$0xf]
  %v81 = vld [vmem:[%s1 + $0x104] sm:$0xf]
  %v82 = vld [vmem:[%s1 + $0x108] sm:$0xf]
  %v83 = vld [vmem:[%s1 + $0x10c] sm:$0xf]
  %v84 = vld [vmem:[%s1 + $0x110] sm:$0xf]
  %v85 = vld [vmem:[%s1 + $0x114] sm:$0xf]
  %v86 = vld [vmem:[%s1 + $0x118] sm:$0xf]
  %v87 = vld [vmem:[%s1 + $0x11c] sm:$0xf]
  %v88 = vld [vmem:[%s2] sm:$0x1]
  %v90 = vlaneseq
  %v91 = vshrl.u32 %v90, 7
  %v92 = vsub.s32 0, %v91
  %v93 = vrot.slane %v88, %v92
  %v96 = vcombine.high %v15, %v15
  %v98 = vunpack.c.l.s4 1966171168
  %v99 = vunpack.c.0.s8 %v98
  %v100 = vlaneseq
  %v101 = vshrl.u32 %v100, 7
  %v102 = vsub.s32 %v99, %v101
  %v103 = vrot.slane %v15, %v102
  %v105 = vunpack.c.l.s4 1966171168
  %v106 = vunpack.c.0.s8 %v105
  %v107 = vlaneseq
  %v108 = vshrl.u32 %v107, 7
  %v109 = vsub.s32 %v106, %v108
  %v110 = vrot.slane %v96, %v109
  %v111 = vcombine.high %v103, %v103
  %v113 = vunpack.c.l.s4 1966171168
  %v114 = vunpack.c.0.s8 %v113
  %v115 = vlaneseq
  %v116 = vshrl.u32 %v115, 7
  %v117 = vsub.s32 %v114, %v116
  %v118 = vrot.slane %v103, %v117
  %v120 = vunpack.c.l.s4 1966171168
  %v121 = vunpack.c.0.s8 %v120
  %v122 = vlaneseq
  %v123 = vshrl.u32 %v122, 7
  %v124 = vsub.s32 %v121, %v123
  %v125 = vrot.slane %v110, %v124
  %v127 = vunpack.c.l.s4 1966171168
  %v128 = vunpack.c.0.s8 %v127
  %v129 = vlaneseq
  %v130 = vshrl.u32 %v129, 7
  %v131 = vsub.s32 %v128, %v130
  %v132 = vrot.slane %v111, %v131
  %v133 = vcombine.high %v118, %v118
  %v134 = vcombine.high %v132, %v132
  %v211 = vunpack.c.l.b16 %v16
  %v212 = vunpack.c.l.b16 %v17
  %v213 = vunpack.c.l.b16 %v18
  %v214 = vunpack.c.l.b16 %v19
  %v215 = vunpack.c.l.b16 %v20
  %v216 = vunpack.c.l.b16 %v21
  %v217 = vunpack.c.l.b16 %v22
  %v218 = vunpack.c.l.b16 %v23
  %v219 = vunpack.c.l.b16 %v24
  %v220 = vunpack.c.l.b16 %v25
  %v221 = vunpack.c.l.b16 %v26
  %v222 = vunpack.c.l.b16 %v27
  %v223 = vunpack.c.l.b16 %v28
  %v224 = vunpack.c.l.b16 %v29
  %v225 = vunpack.c.l.b16 %v30
  %v226 = vunpack.c.l.b16 %v31
  %v227 = vunpack.c.l.b16 %v32
  %v228 = vunpack.c.l.b16 %v33
  %v229 = vunpack.c.l.b16 %v34
  %v230 = vunpack.c.l.b16 %v35
  %v231 = vunpack.c.l.b16 %v36
  %v232 = vunpack.c.l.b16 %v37
  %v233 = vunpack.c.l.b16 %v38
  %v234 = vunpack.c.l.b16 %v39
  %v235 = vunpack.c.l.b16 %v40
  %v236 = vunpack.c.l.b16 %v41
  %v237 = vunpack.c.l.b16 %v42
  %v238 = vunpack.c.l.b16 %v43
  %v239 = vunpack.c.l.b16 %v44
  %v240 = vunpack.c.l.b16 %v45
  %v241 = vunpack.c.l.b16 %v46
  %v242 = vunpack.c.l.b16 %v47
  %v243 = vunpack.c.l.b16 %v48
  %v244 = vunpack.c.l.b16 %v49
  %v245 = vunpack.c.l.b16 %v50
  %v246 = vunpack.c.l.b16 %v51
  %v247 = vunpack.c.l.b16 %v52
  %v248 = vunpack.c.l.b16 %v53
  %v249 = vunpack.c.l.b16 %v54
  %v250 = vunpack.c.l.b16 %v55
  %v251 = vunpack.c.l.b16 %v56
  %v252 = vunpack.c.l.b16 %v57
  %v253 = vunpack.c.l.b16 %v58
  %v254 = vunpack.c.l.b16 %v59
  %v255 = vunpack.c.l.b16 %v60
  %v256 = vunpack.c.l.b16 %v61
  %v257 = vunpack.c.l.b16 %v62
  %v258 = vunpack.c.l.b16 %v63
  %v259 = vunpack.c.l.b16 %v64
  %v260 = vunpack.c.l.b16 %v65
  %v261 = vunpack.c.l.b16 %v66
  %v262 = vunpack.c.l.b16 %v67
  %v263 = vunpack.c.l.b16 %v68
  %v264 = vunpack.c.l.b16 %v69
  %v265 = vunpack.c.l.b16 %v70
  %v266 = vunpack.c.l.b16 %v71
  %v267 = vunpack.c.l.b16 %v72
  %v268 = vunpack.c.l.b16 %v73
  %v269 = vunpack.c.l.b16 %v74
  %v270 = vunpack.c.l.b16 %v75
  %v271 = vunpack.c.l.b16 %v76
  %v272 = vunpack.c.l.b16 %v77
  %v273 = vunpack.c.l.b16 %v78
  %v274 = vunpack.c.l.b16 %v79
  %v275 = vunpack.c.l.b16 %v80
  %v276 = vunpack.c.l.b16 %v81
  %v277 = vunpack.c.l.b16 %v82
  %v278 = vunpack.c.l.b16 %v83
  %v279 = vunpack.c.l.b16 %v84
  %v280 = vunpack.c.l.b16 %v85
  %v281 = vunpack.c.l.b16 %v86
  %v282 = vunpack.c.l.b16 %v87
  %v283 = vpack.c.b16 %v212, %v211
  %v284 = vpack.c.b16 %v214, %v213
  %v285 = vpack.c.b16 %v216, %v215
  %v286 = vpack.c.b16 %v218, %v217
  %v287 = vpack.c.b16 %v220, %v219
  %v288 = vpack.c.b16 %v222, %v221
  %v289 = vpack.c.b16 %v224, %v223
  %v290 = vpack.c.b16 %v226, %v225
  %v291 = vpack.c.b16 %v228, %v227
  %v292 = vpack.c.b16 %v230, %v229
  %v293 = vpack.c.b16 %v232, %v231
  %v294 = vpack.c.b16 %v234, %v233
  %v295 = vpack.c.b16 %v236, %v235
  %v296 = vpack.c.b16 %v238, %v237
  %v297 = vpack.c.b16 %v240, %v239
  %v298 = vpack.c.b16 %v242, %v241
  %v299 = vpack.c.b16 %v244, %v243
  %v300 = vpack.c.b16 %v246, %v245
  %v301 = vpack.c.b16 %v248, %v247
  %v302 = vpack.c.b16 %v250, %v249
  %v303 = vpack.c.b16 %v252, %v251
  %v304 = vpack.c.b16 %v254, %v253
  %v305 = vpack.c.b16 %v256, %v255
  %v306 = vpack.c.b16 %v258, %v257
  %v307 = vpack.c.b16 %v260, %v259
  %v308 = vpack.c.b16 %v262, %v261
  %v309 = vpack.c.b16 %v264, %v263
  %v310 = vpack.c.b16 %v266, %v265
  %v311 = vpack.c.b16 %v268, %v267
  %v312 = vpack.c.b16 %v270, %v269
  %v313 = vpack.c.b16 %v272, %v271
  %v314 = vpack.c.b16 %v274, %v273
  %v315 = vpack.c.b16 %v276, %v275
  %v316 = vpack.c.b16 %v278, %v277
  %v317 = vpack.c.b16 %v280, %v279
  %v318 = vpack.c.b16 %v282, %v281
  %vm355 = vcmask 523264
  %v357 = vsel %vm355, %v125, 0
  %359 = vmatprep.subr.bf16.mxu0 0
  %360 = vmatpush1.bf16.msra.mxu0 %v283
  %361 = vmatprep.subr.bf16.mxu0 0
  %362 = vmatpush1.bf16.msra.mxu0 %v284
  %363 = vmatprep.subr.bf16.mxu0 0
  %364 = vmatpush1.bf16.msra.mxu0 %v285
  %365 = vmatprep.subr.bf16.mxu0 0
  %366 = vmatpush1.bf16.msra.mxu0 %v286
  %367 = vmatprep.subr.bf16.mxu0 0
  %368 = vmatpush1.bf16.msra.mxu0 %v287
  %369 = vmatprep.subr.bf16.mxu0 0
  %370 = vmatpush1.bf16.msra.mxu0 %v288
  %371 = vmatprep.subr.bf16.mxu0 0
  %372 = vmatpush1.bf16.msra.mxu0 %v289
  %373 = vmatprep.subr.bf16.mxu0 0
  %374 = vmatpush1.bf16.msra.mxu0 %v290
  %375 = vmatprep.subr.bf16.mxu0 0
  %376 = vmatpush1.bf16.msra.mxu0 %v291
  %377 = vmatprep.subr.bf16.mxu0 0
  %378 = vmatpush1.bf16.msra.mxu0 %v292
  %379 = vmatprep.subr.bf16.mxu0 0
  %380 = vmatpush1.bf16.msra.mxu0 %v293
  %381 = vmatprep.subr.bf16.mxu0 0
  %382 = vmatpush1.bf16.msra.mxu0 %v294
  %383 = vmatprep.subr.bf16.mxu0 0
  %384 = vmatpush1.bf16.msra.mxu0 %v295
  %385 = vmatprep.subr.bf16.mxu0 0
  %386 = vmatpush1.bf16.msra.mxu0 %v296
  %387 = vmatprep.subr.bf16.mxu0 0
  %388 = vmatpush1.bf16.msra.mxu0 %v297
  %389 = vmatprep.subr.bf16.mxu0 0
  %390 = vmatpush1.bf16.msra.mxu0 %v298
  %391 = vmatprep.mubr.bf16.mxu0 %v132
  %392 = vmatmul.mubr.bf16.gmra.mrb[0].mxu0 %v118
  %v393 = vpop.f32.mrb[0].mxu0
  %v394 = vadd.f32 %v93, %v393
  %v395 = vpop.f32.mrb[0].mxu0
  %v396 = vpop.f32.mrb[0].mxu0
  %v397 = vpop.f32.mrb[0].mxu0
  %398 = vdwg.mxu0
  %399 = vmatprep.subr.bf16.mxu0 0
  %400 = vmatpush1.bf16.msra.mxu0 %v299
  %401 = vmatprep.subr.bf16.mxu0 0
  %402 = vmatpush1.bf16.msra.mxu0 %v300
  %403 = vmatprep.subr.bf16.mxu0 0
  %404 = vmatpush1.bf16.msra.mxu0 %v301
  %405 = vmatprep.subr.bf16.mxu0 0
  %406 = vmatpush1.bf16.msra.mxu0 %v302
  %407 = vmatprep.subr.bf16.mxu0 0
  %408 = vmatpush1.bf16.msra.mxu0 %v303
  %409 = vmatprep.subr.bf16.mxu0 0
  %410 = vmatpush1.bf16.msra.mxu0 %v304
  %411 = vmatprep.subr.bf16.mxu0 0
  %412 = vmatpush1.bf16.msra.mxu0 %v305
  %413 = vmatprep.subr.bf16.mxu0 0
  %414 = vmatpush1.bf16.msra.mxu0 %v306
  %415 = vmatprep.subr.bf16.mxu0 0
  %416 = vmatpush1.bf16.msra.mxu0 %v307
  %417 = vmatprep.subr.bf16.mxu0 0
  %418 = vmatpush1.bf16.msra.mxu0 %v308
  %419 = vmatprep.subr.bf16.mxu0 0
  %420 = vmatpush1.bf16.msra.mxu0 %v309
  %421 = vmatprep.subr.bf16.mxu0 0
  %422 = vmatpush1.bf16.msra.mxu0 %v310
  %423 = vmatprep.subr.bf16.mxu0 0
  %424 = vmatpush1.bf16.msra.mxu0 %v311
  %425 = vmatprep.subr.bf16.mxu0 0
  %426 = vmatpush1.bf16.msra.mxu0 %v312
  %427 = vmatprep.subr.bf16.mxu0 0
  %428 = vmatpush1.bf16.msra.mxu0 %v313
  %429 = vmatprep.subr.bf16.mxu0 0
  %430 = vmatpush1.bf16.msra.mxu0 %v314
  %431 = vmatprep.mubr.bf16.mxu0 %v134
  %432 = vmatmul.mubr.bf16.gmra.mrb[0].mxu0 %v133
  %v433 = vpop.f32.mrb[0].mxu0
  %v434 = vadd.f32 %v394, %v433
  %v435 = vpop.f32.mrb[0].mxu0
  %v436 = vpop.f32.mrb[0].mxu0
  %v437 = vpop.f32.mrb[0].mxu0
  %438 = vdwg.mxu0
  %439 = vmatprep.subr.bf16.mxu0 0
  %440 = vmatpush1.bf16.msra.mxu0 %v315
  %441 = vmatprep.subr.bf16.mxu0 0
  %442 = vmatpush1.bf16.msra.mxu0 %v316
  %443 = vmatprep.subr.bf16.mxu0 0
  %444 = vmatpush1.bf16.msra.mxu0 %v317
  %445 = vmatprep.subr.bf16.mxu0 0
  %446 = vmatpush1.bf16.msra.mxu0 %v318
  %447 = vmatprep.subr.bf16.mxu0 0
  %448 = vmatpush1.bf16.msra.mxu0 0
  %449 = vmatprep.subr.bf16.mxu0 0
  %450 = vmatpush1.bf16.msra.mxu0 0
  %451 = vmatprep.subr.bf16.mxu0 0
  %452 = vmatpush1.bf16.msra.mxu0 0
  %453 = vmatprep.subr.bf16.mxu0 0
  %454 = vmatpush1.bf16.msra.mxu0 0
  %455 = vmatprep.subr.bf16.mxu0 0
  %456 = vmatpush1.bf16.msra.mxu0 0
  %457 = vmatprep.subr.bf16.mxu0 0
  %458 = vmatpush1.bf16.msra.mxu0 0
  %459 = vmatprep.subr.bf16.mxu0 0
  %460 = vmatpush1.bf16.msra.mxu0 0
  %461 = vmatprep.subr.bf16.mxu0 0
  %462 = vmatpush1.bf16.msra.mxu0 0
  %463 = vmatprep.subr.bf16.mxu0 0
  %464 = vmatpush1.bf16.msra.mxu0 0
  %465 = vmatprep.subr.bf16.mxu0 0
  %466 = vmatpush1.bf16.msra.mxu0 0
  %467 = vmatprep.subr.bf16.mxu0 0
  %468 = vmatpush1.bf16.msra.mxu0 0
  %469 = vmatprep.subr.bf16.mxu0 0
  %470 = vmatpush1.bf16.msra.mxu0 0
  %471 = vmatprep.mubr.bf16.mxu0 0
  %472 = vmatmul.mubr.bf16.gmra.mrb[0].mxu0 %v357
  %v473 = vpop.f32.mrb[0].mxu0
  %v474 = vadd.f32 %v434, %v473
  %v475 = vpop.f32.mrb[0].mxu0
  %v476 = vpop.f32.mrb[0].mxu0
  %v477 = vpop.f32.mrb[0].mxu0
  %478 = vdwg.mxu0
  %v479 = vmax.f32 %v474, 0.0
  %v480 = vpack.c.bf16 %v479, %v479
  %vm481 = vcmask 516096
  %482 = vst.msk [vmem:[%s3] sm:$0x1] %vm481, %v480
  // Predicated region
  $region14: #{nature_trunk_forward.6} parent=0 // pred_check
    _
  $region15: #{nature_trunk_forward.6} parent=0 // pred_check_branch
    %484 = sbr.rel (0) target = $region17
  $region16: #{nature_trunk_forward.6} parent=0 // pred_region
    _
  $region17: #{nature_trunk_forward.6} parent=0 // pred_fallthru
    _
  // Predicated region
  $region18: #{nature_trunk_forward.6} parent=0 // pred_check
    _
  $region19: #{nature_trunk_forward.6} parent=0 // pred_check_branch
    %486 = sbr.rel (0) target = $region21
  $region20: #{nature_trunk_forward.6} parent=0 // pred_region
    _
  $region21: #{nature_trunk_forward.6} parent=0 // pred_fallthru
    _

</llo_original>
